<compile_context>
chip_gen: v5e
topology: v5e:2x2
jax: 0.10.0
libtpu: 0.0.40
codegen_flags: <defaults>
</compile_context>

<pallas_src>
import jax
import jax.numpy as jnp
from jax import lax
from jax.experimental import pallas as pl
from jax.experimental.pallas import tpu as pltpu

C = 3
H = W = 224
HW = H * W                     # 50176 = 392 * 128
OUT = 5
LANE = 128
NSPLIT = 2                     # parallel split of the pixel axis (one half per TC on v7x)
SUB = HW // (NSPLIT * LANE)    # 196 sublane-rows per split


def fused_conv1x1_linear_kernel(wc_ref, cb_ref, x_ref, wl_ref, o_ref):
    # wc_ref: (C,)  SMEM  -- 1x1-conv channel weights
    # cb_ref: (1,)  SMEM  -- conv bias
    # x_ref : (C, 1, SUB, LANE)   VMEM -- this split's pixels, per channel
    # wl_ref: (OUT, 1, SUB, LANE) VMEM -- this split's linear-weight columns, per output
    # o_ref : (1, 1, OUT)         VMEM -- this split's partial output row (pre lin_b)

    # 1x1-conv channel mix + conv bias, all VPU (scalar-broadcast FMAs).
    y = (wc_ref[0] * x_ref[0, 0]
         + wc_ref[1] * x_ref[1, 0]
         + wc_ref[2] * x_ref[2, 0]
         + cb_ref[0])                                   # (SUB, LANE) f32

    # Five per-output multiply + full-reduce passes; assemble the (1,1,5) row via
    # iota/select so the block is written with a single vector store.
    col = lax.broadcasted_iota(jnp.int32, (1, 1, OUT), 2)
    row = jnp.zeros((1, 1, OUT), dtype=jnp.float32)
    for j in range(OUT):
        pj = jnp.sum(y * wl_ref[j, 0])                  # scalar partial dot over this split
        row = jnp.where(col == j, pj, row)
    o_ref[...] = row


@jax.jit
def m_forward(x_nchw, conv_w, conv_b, lin_w, lin_b):
    # QuantStub / DeQuantStub are identity in fp32 eager mode.
    # TODO(synk): the post-convert int8 path (observers / qparams) is not modeled.
    x4 = x_nchw.reshape(C, NSPLIT, SUB, LANE)       # free reshape; pixel order == view(1,-1)
    wl4 = lin_w.reshape(OUT, NSPLIT, SUB, LANE)     # free reshape, lane-dense
    wc = conv_w.reshape(C)                          # (3,) from (1, 3, 1, 1)

    partial_rows = pl.pallas_call(
        fused_conv1x1_linear_kernel,
        out_shape=jax.ShapeDtypeStruct((NSPLIT, 1, OUT), jnp.float32),
        grid_spec=pltpu.PrefetchScalarGridSpec(
            num_scalar_prefetch=0,
            grid=(NSPLIT,),
            in_specs=[
                pl.BlockSpec(memory_space=pltpu.MemorySpace.SMEM),        # conv weight (3,)
                pl.BlockSpec(memory_space=pltpu.MemorySpace.SMEM),        # conv bias (1,)
                pl.BlockSpec((C, 1, SUB, LANE), lambda k: (0, k, 0, 0)),  # activations
                pl.BlockSpec((OUT, 1, SUB, LANE), lambda k: (0, k, 0, 0)),# linear weight
            ],
            out_specs=pl.BlockSpec((1, 1, OUT), lambda k: (k, 0, 0)),
        ),
        compiler_params=pltpu.CompilerParams(
            dimension_semantics=("parallel",)),
    )(wc, conv_b, x4, wl4)                           # (NSPLIT, 1, OUT)

    # Combine the two partial rows and add the linear bias (tiny (2,5) op, fuses in XLA).
    return partial_rows.sum(axis=0) + lin_b[None, :]  # (1, OUT)


def m_forward_ref(x_nchw, conv_w, conv_b, lin_w, lin_b):
    # Pure-JAX reference of the PyTorch forward.
    x = x_nchw[0]                                                    # (3, 224, 224)
    conv = jnp.einsum('chw,c->hw', x, conv_w.reshape(C)) + conv_b[0]
    flat = conv.reshape(1, HW)
    return flat @ lin_w.T + lin_b[None, :]


if __name__ == "__main__":
    key = jax.random.PRNGKey(0)
    kx, kcw, kcb, klw, klb = jax.random.split(key, 5)

    # Linear(224*224, 5) after a 3->1 1x1 conv forces the input to (1, 3, 224, 224).
    x = jax.random.normal(kx, (1, C, H, W), dtype=jnp.float32)
    conv_w = jax.random.normal(kcw, (1, C, 1, 1), dtype=jnp.float32) * 0.1
    conv_b = jax.random.normal(kcb, (1,), dtype=jnp.float32) * 0.1
    lin_w = jax.random.normal(klw, (OUT, HW), dtype=jnp.float32) * 0.01
    lin_b = jax.random.normal(klb, (OUT,), dtype=jnp.float32) * 0.1

    out = m_forward(x, conv_w, conv_b, lin_w, lin_b)
    out = jax.block_until_ready(out)

    ref = m_forward_ref(x, conv_w, conv_b, lin_w, lin_b)
    assert out.shape == (1, OUT), out.shape
    assert jnp.allclose(out, ref, rtol=1e-3, atol=1e-3), (out, ref)

    print("KERNEL_OK")
</pallas_src>

<mosaic_0001>
module attributes {stable_mosaic.version = 11 : i64} {
  func.func @fused_conv1x1_linear_kernel(%arg0: i32, %arg1: memref<3xf32, #tpu.memory_space<smem>>, %arg2: memref<1xf32, #tpu.memory_space<smem>>, %arg3: memref<3x1x196x128xf32, #tpu.memory_space<vmem>>, %arg4: memref<5x1x196x128xf32, #tpu.memory_space<vmem>>, %arg5: memref<1x1x5xf32, #tpu.memory_space<vmem>>) attributes {dimension_semantics = [#tpu.dimension_semantics<parallel>], iteration_bounds = array<i64: 2>, scalar_prefetch = 0 : i64, scratch_operands = 0 : i64, tpu.core_type = #tpu.core_type<tc>, window_params = [{transform_indices = @transform_0, window_bounds = array<i64: 3>}, {transform_indices = @transform_1, window_bounds = array<i64: 1>}, {transform_indices = @transform_2, window_bounds = array<i64: 3, 1, 196, 128>}, {transform_indices = @transform_3, window_bounds = array<i64: 5, 1, 196, 128>}, {transform_indices = @transform_4, window_bounds = array<i64: 1, 1, 5>}]} {
    %c0 = arith.constant 0 : index
    %0 = memref.load %arg1[%c0] : memref<3xf32, #tpu.memory_space<smem>>
    %c0_0 = arith.constant 0 : index
    %c0_1 = arith.constant 0 : index
    %c0_2 = arith.constant 0 : index
    %c0_3 = arith.constant 0 : index
    %1 = vector.load %arg3[%c0_0, %c0_1, %c0_2, %c0_3] : memref<3x1x196x128xf32, #tpu.memory_space<vmem>>, vector<1x1x196x128xf32>
    %2 = vector.shape_cast %1 : vector<1x1x196x128xf32> to vector<196x128xf32>
    %3 = vector.broadcast %0 : f32 to vector<196x128xf32>
    %4 = arith.mulf %3, %2 : vector<196x128xf32>
    %c1 = arith.constant 1 : index
    %5 = memref.load %arg1[%c1] : memref<3xf32, #tpu.memory_space<smem>>
    %c1_4 = arith.constant 1 : index
    %c0_5 = arith.constant 0 : index
    %c0_6 = arith.constant 0 : index
    %c0_7 = arith.constant 0 : index
    %6 = vector.load %arg3[%c1_4, %c0_5, %c0_6, %c0_7] : memref<3x1x196x128xf32, #tpu.memory_space<vmem>>, vector<1x1x196x128xf32>
    %7 = vector.shape_cast %6 : vector<1x1x196x128xf32> to vector<196x128xf32>
    %8 = vector.broadcast %5 : f32 to vector<196x128xf32>
    %9 = arith.mulf %8, %7 : vector<196x128xf32>
    %10 = arith.addf %4, %9 : vector<196x128xf32>
    %c2 = arith.constant 2 : index
    %11 = memref.load %arg1[%c2] : memref<3xf32, #tpu.memory_space<smem>>
    %c2_8 = arith.constant 2 : index
    %c0_9 = arith.constant 0 : index
    %c0_10 = arith.constant 0 : index
    %c0_11 = arith.constant 0 : index
    %12 = vector.load %arg3[%c2_8, %c0_9, %c0_10, %c0_11] : memref<3x1x196x128xf32, #tpu.memory_space<vmem>>, vector<1x1x196x128xf32>
    %13 = vector.shape_cast %12 : vector<1x1x196x128xf32> to vector<196x128xf32>
    %14 = vector.broadcast %11 : f32 to vector<196x128xf32>
    %15 = arith.mulf %14, %13 : vector<196x128xf32>
    %16 = arith.addf %10, %15 : vector<196x128xf32>
    %c0_12 = arith.constant 0 : index
    %17 = memref.load %arg2[%c0_12] : memref<1xf32, #tpu.memory_space<smem>>
    %18 = vector.broadcast %17 : f32 to vector<196x128xf32>
    %19 = arith.addf %16, %18 : vector<196x128xf32>
    %20 = tpu.iota {dimensions = array<i32: 2>} : vector<1x1x5xi32>
    %cst = arith.constant 0.000000e+00 : f32
    %21 = vector.broadcast %cst : f32 to vector<1x1x5xf32>
    %c0_13 = arith.constant 0 : index
    %c0_14 = arith.constant 0 : index
    %c0_15 = arith.constant 0 : index
    %c0_16 = arith.constant 0 : index
    %22 = vector.load %arg4[%c0_13, %c0_14, %c0_15, %c0_16] : memref<5x1x196x128xf32, #tpu.memory_space<vmem>>, vector<1x1x196x128xf32>
    %23 = vector.shape_cast %22 : vector<1x1x196x128xf32> to vector<196x128xf32>
    %24 = arith.mulf %19, %23 : vector<196x128xf32>
    %25 = vector.shape_cast %24 : vector<196x128xf32> to vector<1x196x128xf32>
    %cst_17 = arith.constant dense<0.000000e+00> : vector<1xf32>
    %26 = vector.multi_reduction <add>, %25, %cst_17 [1, 2] : vector<1x196x128xf32> to vector<1xf32>
    %27 = vector.shape_cast %26 : vector<1xf32> to vector<1x1x1xf32>
    %28 = vector.extract %27[0, 0, 0] : f32 from vector<1x1x1xf32>
    %c0_i32 = arith.constant 0 : i32
    %29 = vector.broadcast %c0_i32 : i32 to vector<1x1x5xi32>
    %30 = arith.cmpi eq, %20, %29 : vector<1x1x5xi32>
    %31 = vector.broadcast %28 : f32 to vector<1x1x5xf32>
    %32 = arith.select %30, %31, %21 : vector<1x1x5xi1>, vector<1x1x5xf32>
    %c1_18 = arith.constant 1 : index
    %c0_19 = arith.constant 0 : index
    %c0_20 = arith.constant 0 : index
    %c0_21 = arith.constant 0 : index
    %33 = vector.load %arg4[%c1_18, %c0_19, %c0_20, %c0_21] : memref<5x1x196x128xf32, #tpu.memory_space<vmem>>, vector<1x1x196x128xf32>
    %34 = vector.shape_cast %33 : vector<1x1x196x128xf32> to vector<196x128xf32>
    %35 = arith.mulf %19, %34 : vector<196x128xf32>
    %36 = vector.shape_cast %35 : vector<196x128xf32> to vector<1x196x128xf32>
    %cst_22 = arith.constant dense<0.000000e+00> : vector<1xf32>
    %37 = vector.multi_reduction <add>, %36, %cst_22 [1, 2] : vector<1x196x128xf32> to vector<1xf32>
    %38 = vector.shape_cast %37 : vector<1xf32> to vector<1x1x1xf32>
    %39 = vector.extract %38[0, 0, 0] : f32 from vector<1x1x1xf32>
    %c1_i32 = arith.constant 1 : i32
    %40 = vector.broadcast %c1_i32 : i32 to vector<1x1x5xi32>
    %41 = arith.cmpi eq, %20, %40 : vector<1x1x5xi32>
    %42 = vector.broadcast %39 : f32 to vector<1x1x5xf32>
    %43 = arith.select %41, %42, %32 : vector<1x1x5xi1>, vector<1x1x5xf32>
    %c2_23 = arith.constant 2 : index
    %c0_24 = arith.constant 0 : index
    %c0_25 = arith.constant 0 : index
    %c0_26 = arith.constant 0 : index
    %44 = vector.load %arg4[%c2_23, %c0_24, %c0_25, %c0_26] : memref<5x1x196x128xf32, #tpu.memory_space<vmem>>, vector<1x1x196x128xf32>
    %45 = vector.shape_cast %44 : vector<1x1x196x128xf32> to vector<196x128xf32>
    %46 = arith.mulf %19, %45 : vector<196x128xf32>
    %47 = vector.shape_cast %46 : vector<196x128xf32> to vector<1x196x128xf32>
    %cst_27 = arith.constant dense<0.000000e+00> : vector<1xf32>
    %48 = vector.multi_reduction <add>, %47, %cst_27 [1, 2] : vector<1x196x128xf32> to vector<1xf32>
    %49 = vector.shape_cast %48 : vector<1xf32> to vector<1x1x1xf32>
    %50 = vector.extract %49[0, 0, 0] : f32 from vector<1x1x1xf32>
    %c2_i32 = arith.constant 2 : i32
    %51 = vector.broadcast %c2_i32 : i32 to vector<1x1x5xi32>
    %52 = arith.cmpi eq, %20, %51 : vector<1x1x5xi32>
    %53 = vector.broadcast %50 : f32 to vector<1x1x5xf32>
    %54 = arith.select %52, %53, %43 : vector<1x1x5xi1>, vector<1x1x5xf32>
    %c3 = arith.constant 3 : index
    %c0_28 = arith.constant 0 : index
    %c0_29 = arith.constant 0 : index
    %c0_30 = arith.constant 0 : index
    %55 = vector.load %arg4[%c3, %c0_28, %c0_29, %c0_30] : memref<5x1x196x128xf32, #tpu.memory_space<vmem>>, vector<1x1x196x128xf32>
    %56 = vector.shape_cast %55 : vector<1x1x196x128xf32> to vector<196x128xf32>
    %57 = arith.mulf %19, %56 : vector<196x128xf32>
    %58 = vector.shape_cast %57 : vector<196x128xf32> to vector<1x196x128xf32>
    %cst_31 = arith.constant dense<0.000000e+00> : vector<1xf32>
    %59 = vector.multi_reduction <add>, %58, %cst_31 [1, 2] : vector<1x196x128xf32> to vector<1xf32>
    %60 = vector.shape_cast %59 : vector<1xf32> to vector<1x1x1xf32>
    %61 = vector.extract %60[0, 0, 0] : f32 from vector<1x1x1xf32>
    %c3_i32 = arith.constant 3 : i32
    %62 = vector.broadcast %c3_i32 : i32 to vector<1x1x5xi32>
    %63 = arith.cmpi eq, %20, %62 : vector<1x1x5xi32>
    %64 = vector.broadcast %61 : f32 to vector<1x1x5xf32>
    %65 = arith.select %63, %64, %54 : vector<1x1x5xi1>, vector<1x1x5xf32>
    %c4 = arith.constant 4 : index
    %c0_32 = arith.constant 0 : index
    %c0_33 = arith.constant 0 : index
    %c0_34 = arith.constant 0 : index
    %66 = vector.load %arg4[%c4, %c0_32, %c0_33, %c0_34] : memref<5x1x196x128xf32, #tpu.memory_space<vmem>>, vector<1x1x196x128xf32>
    %67 = vector.shape_cast %66 : vector<1x1x196x128xf32> to vector<196x128xf32>
    %68 = arith.mulf %19, %67 : vector<196x128xf32>
    %69 = vector.shape_cast %68 : vector<196x128xf32> to vector<1x196x128xf32>
    %cst_35 = arith.constant dense<0.000000e+00> : vector<1xf32>
    %70 = vector.multi_reduction <add>, %69, %cst_35 [1, 2] : vector<1x196x128xf32> to vector<1xf32>
    %71 = vector.shape_cast %70 : vector<1xf32> to vector<1x1x1xf32>
    %72 = vector.extract %71[0, 0, 0] : f32 from vector<1x1x1xf32>
    %c4_i32 = arith.constant 4 : i32
    %73 = vector.broadcast %c4_i32 : i32 to vector<1x1x5xi32>
    %74 = arith.cmpi eq, %20, %73 : vector<1x1x5xi32>
    %75 = vector.broadcast %72 : f32 to vector<1x1x5xf32>
    %76 = arith.select %74, %75, %65 : vector<1x1x5xi1>, vector<1x1x5xf32>
    %c0_36 = arith.constant 0 : index
    %c0_37 = arith.constant 0 : index
    %c0_38 = arith.constant 0 : index
    %77 = vector.load %arg5[%c0_36, %c0_37, %c0_38] : memref<1x1x5xf32, #tpu.memory_space<vmem>>, vector<1x1x5xf32>
    tpu.vector_store %arg5[%c0_36, %c0_37, %c0_38], %76 {strides = array<i32>} : memref<1x1x5xf32, #tpu.memory_space<vmem>>, vector<1x1x5xf32>,
    return
  }
  func.func @transform_0(%arg0: i32) -> i32 {
    %c0_i32 = arith.constant 0 : i32
    %c0_i32_0 = arith.constant 0 : i32
    return %c0_i32 : i32
  }
  func.func @transform_1(%arg0: i32) -> i32 {
    %c0_i32 = arith.constant 0 : i32
    %c0_i32_0 = arith.constant 0 : i32
    return %c0_i32 : i32
  }
  func.func @transform_2(%arg0: i32) -> (i32, i32, i32, i32) {
    %c0_i32 = arith.constant 0 : i32
    %c0_i32_0 = arith.constant 0 : i32
    %c0_i32_1 = arith.constant 0 : i32
    %c0_i32_2 = arith.constant 0 : i32
    return %c0_i32, %arg0, %c0_i32_0, %c0_i32_1 : i32, i32, i32, i32
  }
  func.func @transform_3(%arg0: i32) -> (i32, i32, i32, i32) {
    %c0_i32 = arith.constant 0 : i32
    %c0_i32_0 = arith.constant 0 : i32
    %c0_i32_1 = arith.constant 0 : i32
    %c0_i32_2 = arith.constant 0 : i32
    return %c0_i32, %arg0, %c0_i32_0, %c0_i32_1 : i32, i32, i32, i32
  }
  func.func @transform_4(%arg0: i32) -> (i32, i32, i32) {
    %c0_i32 = arith.constant 0 : i32
    %c0_i32_0 = arith.constant 0 : i32
    %c0_i32_1 = arith.constant 0 : i32
    return %arg0, %c0_i32, %c0_i32_0 : i32, i32, i32
  }
}

</mosaic_0001>

<llo_original>
// kernel: m_forward.1
$region0: #{m_forward.1}
  #allocation0 [shape = 'u32[]', space=smem, size = 0x4, offset = 0x4, fixed_abs, tag = 'smem constant byte address 0x4 - core index']
  #allocation1 [shape = 'u32[72,128]{1,0:T(1,128)}', space=vmem, size = 0x9000, scoped, tag = 'internal scratch']
  #allocation2 [shape = 'f32[1]{0:T(128)S(6)}', space=smem, size = 0x200, scoped, tag = 'scoped memory for m_forward.1']
  %s0 = inlined_call_operand.vmem [shape: f32[3], index: 0, kind: input, shape index: {}]
  %s1 = inlined_call_operand.<no memory space> [shape: f32[1], index: 1, kind: input, shape index: {}]
  %s2 = inlined_call_operand.vmem [shape: f32[3,2,196,128], index: 2, kind: input, shape index: {}]
  %s3 = inlined_call_operand.vmem [shape: f32[5,2,196,128], index: 3, kind: input, shape index: {}]
  %s4 = inlined_call_operand.vmem [shape: f32[2,1,5], index: 4, kind: output, shape index: {}]
  %s5 = sld [smem:[#allocation0]]
  $region129: #{m_forward.1} parent=0
    _
  %s7 = ssub.s32 1, %s5
  %s8 = scalar_select 0, %s7, %s5
  %9 = sst [smem:[#allocation2]] %s1
  $region1: #{m_forward.1} parent=0
    #allocation3 [shape = 'u8[512]{0}', space=smem, size = 0x200, scoped, tag = 'input window, operand 0, single buffered']
    #allocation4 [shape = 's32[2]{0}', space=sflag, size = 0x8, scoped, tag = 'scoped memory for m_forward.1']
    #allocation5 [shape = 'u8[614400]{0}', space=vmem, size = 0x96000, scoped, tag = 'input window, operand 2']
    #allocation6 [shape = 'u8[1024000]{0}', space=vmem, size = 0xfa000, scoped, tag = 'input window, operand 3']
    %10 = vsyncpa [#allocation4], 0
    loop: start=0, step=1, limit=4
    $region2: #{m_forward.1} parent=1 // loop_pre_header
      _
    $region3: #{m_forward.1} parent=1 // loop_header
      %s12 = sphi 0, %s16
      %p13 = scmp.ge.s32.totalorder %s12, 4
      %s20 = sphi 0, %s20
      %s22 = sphi 0, %s20
      %s23 = sphi 0, %s22
      %s37 = sphi 0, %s23
      %s41 = sphi 0, %s41
      %s43 = sphi 0, %s41
      %s44 = sphi 0, %s43
      %s58 = sphi 0, %s44
      %s64 = sphi 0, %s66
      %s67 = sphi 0, %s64
      %s68 = sphi 0, %s67
      %s84 = sphi 0, %s68
      %s90 = sphi 0, %s92
      %s93 = sphi 0, %s90
      %s94 = sphi 0, %s93
      %s110 = sphi 0, %s94
      %s116 = sphi 0, %s118
      %s119 = sphi 0, %s116
      %s120 = sphi 0, %s119
      %s136 = sphi 0, %s120
    $region4: #{m_forward.1} parent=1 // loop_header_branch
      %15 = sbr.rel (%p13) target = $region8
    $region5: #{m_forward.1} parent=1 // loop_body
      %s17 = ssub.s32 %s12, 1
      %s18 = ssub.s32 %s12, 2
      %s19 = sadd.s32 %s12, 1
      %s21 = sadd.s32 %s20, 1
      %p24 = scmp.eq.s32.totalorder %s12, 1
      %p25 = scmp.ne.s32.totalorder %s20, %s22
      %p26 = scmp.eq.s32.totalorder %s12, 0
      %p27 = por %p25, %p26
      %p28 = scmp.ne.s32.totalorder %s20, %s22
      %p29 = scmp.eq.s32.totalorder %s17, 1
      %p30 = por %p28, %p29
      %p31 = scmp.ne.s32.totalorder %s22, %s23
      %p32 = scmp.eq.s32.totalorder %s17, 0
      %p33 = por %p31, %p32
      %p34 = scmp.ne.s32.totalorder %s22, %s23
      %p35 = scmp.eq.s32.totalorder %s18, 1
      %p36 = por %p34, %p35
      %p38 = scmp.ne.s32.totalorder %s23, %s37
      %p39 = scmp.eq.s32.totalorder %s18, 0
      %p40 = por %p38, %p39
      %s42 = sadd.s32 %s41, 1
      %p45 = scmp.eq.s32.totalorder %s12, 1
      %p46 = scmp.ne.s32.totalorder %s41, %s43
      %p47 = scmp.eq.s32.totalorder %s12, 0
      %p48 = por %p46, %p47
      %p49 = scmp.ne.s32.totalorder %s41, %s43
      %p50 = scmp.eq.s32.totalorder %s17, 1
      %p51 = por %p49, %p50
      %p52 = scmp.ne.s32.totalorder %s43, %s44
      %p53 = scmp.eq.s32.totalorder %s17, 0
      %p54 = por %p52, %p53
      %p55 = scmp.ne.s32.totalorder %s43, %s44
      %p56 = scmp.eq.s32.totalorder %s18, 1
      %p57 = por %p55, %p56
      %p59 = scmp.ne.s32.totalorder %s44, %s58
      %p60 = scmp.eq.s32.totalorder %s18, 0
      %p61 = por %p59, %p60
      %s62 = ssub.s32 %s12, %s19
      %p63 = scmp.eq.s32.totalorder %s62, 0
      %s65 = sadd.s32 %s64, 1
      %s66 = scalar_select %p63, %s64, %s65
      %p69 = pneg %p63
      %p70 = scmp.eq.s32.totalorder %s12, 1
      %p71 = por %p69, %p70
      %p72 = scmp.ne.s32.totalorder %s64, %s67
      %p73 = scmp.eq.s32.totalorder %s12, 0
      %p74 = por %p72, %p73
      %p75 = scmp.ne.s32.totalorder %s64, %s67
      %p76 = scmp.eq.s32.totalorder %s17, 1
      %p77 = por %p75, %p76
      %p78 = scmp.ne.s32.totalorder %s67, %s68
      %p79 = scmp.eq.s32.totalorder %s17, 0
      %p80 = por %p78, %p79
      %p81 = scmp.ne.s32.totalorder %s67, %s68
      %p82 = scmp.eq.s32.totalorder %s18, 1
      %p83 = por %p81, %p82
      %p85 = scmp.ne.s32.totalorder %s68, %s84
      %p86 = scmp.eq.s32.totalorder %s18, 0
      %p87 = por %p85, %p86
      %s88 = ssub.s32 %s12, %s19
      %p89 = scmp.eq.s32.totalorder %s88, 0
      %s91 = sadd.s32 %s90, 1
      %s92 = scalar_select %p89, %s90, %s91
      %p95 = pneg %p89
      %p96 = scmp.eq.s32.totalorder %s12, 1
      %p97 = por %p95, %p96
      %p98 = scmp.ne.s32.totalorder %s90, %s93
      %p99 = scmp.eq.s32.totalorder %s12, 0
      %p100 = por %p98, %p99
      %p101 = scmp.ne.s32.totalorder %s90, %s93
      %p102 = scmp.eq.s32.totalorder %s17, 1
      %p103 = por %p101, %p102
      %p104 = scmp.ne.s32.totalorder %s93, %s94
      %p105 = scmp.eq.s32.totalorder %s17, 0
      %p106 = por %p104, %p105
      %p107 = scmp.ne.s32.totalorder %s93, %s94
      %p108 = scmp.eq.s32.totalorder %s18, 1
      %p109 = por %p107, %p108
      %p111 = scmp.ne.s32.totalorder %s94, %s110
      %p112 = scmp.eq.s32.totalorder %s18, 0
      %p113 = por %p111, %p112
      %s114 = ssub.s32 %s12, %s19
      %p115 = scmp.eq.s32.totalorder %s114, 0
      %s117 = sadd.s32 %s116, 1
      %s118 = scalar_select %p115, %s116, %s117
      %p121 = pneg %p115
      %p122 = scmp.eq.s32.totalorder %s12, 1
      %p123 = por %p121, %p122
      %p124 = scmp.ne.s32.totalorder %s116, %s119
      %p125 = scmp.eq.s32.totalorder %s12, 0
      %p126 = por %p124, %p125
      %p127 = scmp.ne.s32.totalorder %s116, %s119
      %p128 = scmp.eq.s32.totalorder %s17, 1
      %p129 = por %p127, %p128
      %p130 = scmp.ne.s32.totalorder %s119, %s120
      %p131 = scmp.eq.s32.totalorder %s17, 0
      %p132 = por %p130, %p131
      %p133 = scmp.ne.s32.totalorder %s119, %s120
      %p134 = scmp.eq.s32.totalorder %s18, 1
      %p135 = por %p133, %p134
      %p137 = scmp.ne.s32.totalorder %s120, %s136
      %p138 = scmp.eq.s32.totalorder %s18, 0
      %p139 = por %p137, %p138
      %p140 = scmp.le.s32.totalorder 1, %s12
      %p141 = scmp.lt.s32.totalorder %s12, 3
      %p142 = pnand %p140, %p141
      %p143 = pneg %p142
      // Predicated region
      $region9: #{m_forward.1} parent=5 // pred_check
        _
      $region10: #{m_forward.1} parent=5 // pred_check_branch
        %145 = sbr.rel (%p142) target = $region12
      $region11: #{m_forward.1} parent=5 // pred_region
        %s146 = ssub.s32 %s12, 1
        // Predicated region
        $region13: #{m_forward.1} parent=11 // pred_check
          %p147 = pneg %p33
        $region14: #{m_forward.1} parent=11 // pred_check_branch
          %149 = sbr.rel (%p147) target = $region16
        $region15: #{m_forward.1} parent=11 // pred_region
          %151 = vsyncadd [#allocation4], 0
          %s153 = sshll.u32 %s0, 4
          %s154 = int_to_ptr.vmem [resolvable:$true] %s153
          %156 = dma.vmem_to_smem %s154, 16, [#allocation3], [#allocation4]
        $region16: #{m_forward.1} parent=11 // pred_fallthru
          _
        // Predicated region
        $region17: #{m_forward.1} parent=11 // pred_check
          %p157 = pneg %p54
        $region18: #{m_forward.1} parent=11 // pred_check_branch
          %159 = sbr.rel (%p157) target = $region20
        $region19: #{m_forward.1} parent=11 // pred_region
          _
        $region20: #{m_forward.1} parent=11 // pred_fallthru
          _
      $region12: #{m_forward.1} parent=5 // pred_fallthru
        _
      %p160 = scmp.lt.s32.totalorder %s12, 2
      // Predicated region
      $region21: #{m_forward.1} parent=5 // pred_check
        %p161 = pneg %p160
      $region22: #{m_forward.1} parent=5 // pred_check_branch
        %163 = sbr.rel (%p161) target = $region24
      $region23: #{m_forward.1} parent=5 // pred_region
        // Predicated region
        $region25: #{m_forward.1} parent=23 // pred_check
          %p164 = pneg %p74
        $region26: #{m_forward.1} parent=23 // pred_check_branch
          %166 = sbr.rel (%p164) target = $region28
        $region27: #{m_forward.1} parent=23 // pred_region
          %s167 = sand.u32 %s64, 1
          %s168 = sand.u32 %s64, 1
          %s169 = smul.addr %s168, 600
          %s170 = scalar_lea.vmem [#allocation5], %s169
          %s171 = smul.addr %s12, 25
          %s172 = smul.addr %s171, 8
          %s173 = scalar_lea.vmem %s2, %s172
          // Predicated region
          $region29: #{m_forward.1} parent=27 // pred_check
            _
          $region30: #{m_forward.1} parent=27 // pred_check_branch
            %175 = sbr.rel (0) target = $region32
          $region31: #{m_forward.1} parent=27 // pred_region
            // Predicated region
            $region33: #{m_forward.1} parent=31 // pred_check
              _
            $region34: #{m_forward.1} parent=31 // pred_check_branch
              %177 = sbr.rel (0) target = $region36
            $region35: #{m_forward.1} parent=31 // pred_region
              // Predicated region
              $region48: #{m_forward.1} parent=35 // pred_check
                _
              $region49: #{m_forward.1} parent=35 // pred_check_branch
                %341 = sbr.rel (0) target = $region51
              $region50: #{m_forward.1} parent=35 // pred_region
                loop: start=0, step=1, limit=1
                $region52: #{m_forward.1} parent=50 // loop_pre_header
                  _
                $region53: #{m_forward.1} parent=50 // loop_header
                  %s343 = sphi 0, %s347
                  %p344 = scmp.ge.s32.totalorder %s343, 1
                  %s348 = sphi %s173, %s173
                  %s349 = sphi %s170, %s170
                $region54: #{m_forward.1} parent=50 // loop_header_branch
                  %346 = sbr.rel (%p344) target = $region58
                $region55: #{m_forward.1} parent=50 // loop_body
                  %v350 = vld [vmem:[%s348] sm:$0xff]
                  %351 = vst [vmem:[%s349] sm:$0xff] %v350
                  %v352 = vld [vmem:[%s348 + $0x8] sm:$0xff]
                  %353 = vst [vmem:[%s349 + $0x8] sm:$0xff] %v352
                  %v354 = vld [vmem:[%s348 + $0x10] sm:$0xff]
                  %355 = vst [vmem:[%s349 + $0x10] sm:$0xff] %v354
                  %v356 = vld [vmem:[%s348 + $0x18] sm:$0xff]
                  %357 = vst [vmem:[%s349 + $0x18] sm:$0xff] %v356
                  %v358 = vld [vmem:[%s348 + $0x20] sm:$0xff]
                  %359 = vst [vmem:[%s349 + $0x20] sm:$0xff] %v358
                  %v360 = vld [vmem:[%s348 + $0x28] sm:$0xff]
                  %361 = vst [vmem:[%s349 + $0x28] sm:$0xff] %v360
                  %v362 = vld [vmem:[%s348 + $0x30] sm:$0xff]
                  %363 = vst [vmem:[%s349 + $0x30] sm:$0xff] %v362
                  %v364 = vld [vmem:[%s348 + $0x38] sm:$0xff]
                  %365 = vst [vmem:[%s349 + $0x38] sm:$0xff] %v364
                  %v366 = vld [vmem:[%s348 + $0x40] sm:$0xff]
                  %367 = vst [vmem:[%s349 + $0x40] sm:$0xff] %v366
                  %v368 = vld [vmem:[%s348 + $0x48] sm:$0xff]
                  %369 = vst [vmem:[%s349 + $0x48] sm:$0xff] %v368
                  %v370 = vld [vmem:[%s348 + $0x50] sm:$0xff]
                  %371 = vst [vmem:[%s349 + $0x50] sm:$0xff] %v370
                  %v372 = vld [vmem:[%s348 + $0x58] sm:$0xff]
                  %373 = vst [vmem:[%s349 + $0x58] sm:$0xff] %v372
                  %v374 = vld [vmem:[%s348 + $0x60] sm:$0xff]
                  %375 = vst [vmem:[%s349 + $0x60] sm:$0xff] %v374
                  %v376 = vld [vmem:[%s348 + $0x68] sm:$0xff]
                  %377 = vst [vmem:[%s349 + $0x68] sm:$0xff] %v376
                  %v378 = vld [vmem:[%s348 + $0x70] sm:$0xff]
                  %379 = vst [vmem:[%s349 + $0x70] sm:$0xff] %v378
                  %v380 = vld [vmem:[%s348 + $0x78] sm:$0xff]
                  %381 = vst [vmem:[%s349 + $0x78] sm:$0xff] %v380
                  %v382 = vld [vmem:[%s348 + $0x80] sm:$0xff]
                  %383 = vst [vmem:[%s349 + $0x80] sm:$0xff] %v382
                  %v384 = vld [vmem:[%s348 + $0x88] sm:$0xff]
                  %385 = vst [vmem:[%s349 + $0x88] sm:$0xff] %v384
                  %v386 = vld [vmem:[%s348 + $0x90] sm:$0xff]
                  %387 = vst [vmem:[%s349 + $0x90] sm:$0xff] %v386
                  %v388 = vld [vmem:[%s348 + $0x98] sm:$0xff]
                  %389 = vst [vmem:[%s349 + $0x98] sm:$0xff] %v388
                  %v390 = vld [vmem:[%s348 + $0xa0] sm:$0xff]
                  %391 = vst [vmem:[%s349 + $0xa0] sm:$0xff] %v390
                  %v392 = vld [vmem:[%s348 + $0xa8] sm:$0xff]
                  %393 = vst [vmem:[%s349 + $0xa8] sm:$0xff] %v392
                  %v394 = vld [vmem:[%s348 + $0xb0] sm:$0xff]
                  %395 = vst [vmem:[%s349 + $0xb0] sm:$0xff] %v394
                  %v396 = vld [vmem:[%s348 + $0xb8] sm:$0xff]
                  %397 = vst [vmem:[%s349 + $0xb8] sm:$0xff] %v396
                  %v398 = vld [vmem:[%s348 + $0xc0] sm:$0xff]
                  %399 = vst [vmem:[%s349 + $0xc0] sm:$0xff] %v398
                  %v400 = vld [vmem:[%s348 + $0x190] sm:$0xff]
                  %401 = vst [vmem:[%s349 + $0xc8] sm:$0xff] %v400
                  %v402 = vld [vmem:[%s348 + $0x198] sm:$0xff]
                  %403 = vst [vmem:[%s349 + $0xd0] sm:$0xff] %v402
                  %v404 = vld [vmem:[%s348 + $0x1a0] sm:$0xff]
                  %405 = vst [vmem:[%s349 + $0xd8] sm:$0xff] %v404
                  %v406 = vld [vmem:[%s348 + $0x1a8] sm:$0xff]
                  %407 = vst [vmem:[%s349 + $0xe0] sm:$0xff] %v406
                  %v408 = vld [vmem:[%s348 + $0x1b0] sm:$0xff]
                  %409 = vst [vmem:[%s349 + $0xe8] sm:$0xff] %v408
                  %v410 = vld [vmem:[%s348 + $0x1b8] sm:$0xff]
                  %411 = vst [vmem:[%s349 + $0xf0] sm:$0xff] %v410
                  %v412 = vld [vmem:[%s348 + $0x1c0] sm:$0xff]
                  %413 = vst [vmem:[%s349 + $0xf8] sm:$0xff] %v412
                  %v414 = vld [vmem:[%s348 + $0x1c8] sm:$0xff]
                  %415 = vst [vmem:[%s349 + $0x100] sm:$0xff] %v414
                  %v416 = vld [vmem:[%s348 + $0x1d0] sm:$0xff]
                  %417 = vst [vmem:[%s349 + $0x108] sm:$0xff] %v416
                  %v418 = vld [vmem:[%s348 + $0x1d8] sm:$0xff]
                  %419 = vst [vmem:[%s349 + $0x110] sm:$0xff] %v418
                  %v420 = vld [vmem:[%s348 + $0x1e0] sm:$0xff]
                  %421 = vst [vmem:[%s349 + $0x118] sm:$0xff] %v420
                  %v422 = vld [vmem:[%s348 + $0x1e8] sm:$0xff]
                  %423 = vst [vmem:[%s349 + $0x120] sm:$0xff] %v422
                  %v424 = vld [vmem:[%s348 + $0x1f0] sm:$0xff]
                  %425 = vst [vmem:[%s349 + $0x128] sm:$0xff] %v424
                  %v426 = vld [vmem:[%s348 + $0x1f8] sm:$0xff]
                  %427 = vst [vmem:[%s349 + $0x130] sm:$0xff] %v426
                  %v428 = vld [vmem:[%s348 + $0x200] sm:$0xff]
                  %429 = vst [vmem:[%s349 + $0x138] sm:$0xff] %v428
                  %v430 = vld [vmem:[%s348 + $0x208] sm:$0xff]
                  %431 = vst [vmem:[%s349 + $0x140] sm:$0xff] %v430
                  %v432 = vld [vmem:[%s348 + $0x210] sm:$0xff]
                  %433 = vst [vmem:[%s349 + $0x148] sm:$0xff] %v432
                  %v434 = vld [vmem:[%s348 + $0x218] sm:$0xff]
                  %435 = vst [vmem:[%s349 + $0x150] sm:$0xff] %v434
                  %v436 = vld [vmem:[%s348 + $0x220] sm:$0xff]
                  %437 = vst [vmem:[%s349 + $0x158] sm:$0xff] %v436
                  %v438 = vld [vmem:[%s348 + $0x228] sm:$0xff]
                  %439 = vst [vmem:[%s349 + $0x160] sm:$0xff] %v438
                  %v440 = vld [vmem:[%s348 + $0x230] sm:$0xff]
                  %441 = vst [vmem:[%s349 + $0x168] sm:$0xff] %v440
                  %v442 = vld [vmem:[%s348 + $0x238] sm:$0xff]
                  %443 = vst [vmem:[%s349 + $0x170] sm:$0xff] %v442
                  %v444 = vld [vmem:[%s348 + $0x240] sm:$0xff]
                  %445 = vst [vmem:[%s349 + $0x178] sm:$0xff] %v444
                  %v446 = vld [vmem:[%s348 + $0x248] sm:$0xff]
                  %447 = vst [vmem:[%s349 + $0x180] sm:$0xff] %v446
                  %v448 = vld [vmem:[%s348 + $0x250] sm:$0xff]
                  %449 = vst [vmem:[%s349 + $0x188] sm:$0xff] %v448
                  %v450 = vld [vmem:[%s348 + $0x320] sm:$0xff]
                  %451 = vst [vmem:[%s349 + $0x190] sm:$0xff] %v450
                  %v452 = vld [vmem:[%s348 + $0x328] sm:$0xff]
                  %453 = vst [vmem:[%s349 + $0x198] sm:$0xff] %v452
                  %v454 = vld [vmem:[%s348 + $0x330] sm:$0xff]
                  %455 = vst [vmem:[%s349 + $0x1a0] sm:$0xff] %v454
                  %v456 = vld [vmem:[%s348 + $0x338] sm:$0xff]
                  %457 = vst [vmem:[%s349 + $0x1a8] sm:$0xff] %v456
                  %v458 = vld [vmem:[%s348 + $0x340] sm:$0xff]
                  %459 = vst [vmem:[%s349 + $0x1b0] sm:$0xff] %v458
                  %v460 = vld [vmem:[%s348 + $0x348] sm:$0xff]
                  %461 = vst [vmem:[%s349 + $0x1b8] sm:$0xff] %v460
                  %v462 = vld [vmem:[%s348 + $0x350] sm:$0xff]
                  %463 = vst [vmem:[%s349 + $0x1c0] sm:$0xff] %v462
                  %v464 = vld [vmem:[%s348 + $0x358] sm:$0xff]
                  %465 = vst [vmem:[%s349 + $0x1c8] sm:$0xff] %v464
                  %v466 = vld [vmem:[%s348 + $0x360] sm:$0xff]
                  %467 = vst [vmem:[%s349 + $0x1d0] sm:$0xff] %v466
                  %v468 = vld [vmem:[%s348 + $0x368] sm:$0xff]
                  %469 = vst [vmem:[%s349 + $0x1d8] sm:$0xff] %v468
                  %v470 = vld [vmem:[%s348 + $0x370] sm:$0xff]
                  %471 = vst [vmem:[%s349 + $0x1e0] sm:$0xff] %v470
                  %v472 = vld [vmem:[%s348 + $0x378] sm:$0xff]
                  %473 = vst [vmem:[%s349 + $0x1e8] sm:$0xff] %v472
                  %v474 = vld [vmem:[%s348 + $0x380] sm:$0xff]
                  %475 = vst [vmem:[%s349 + $0x1f0] sm:$0xff] %v474
                  %v476 = vld [vmem:[%s348 + $0x388] sm:$0xff]
                  %477 = vst [vmem:[%s349 + $0x1f8] sm:$0xff] %v476
                  %v478 = vld [vmem:[%s348 + $0x390] sm:$0xff]
                  %479 = vst [vmem:[%s349 + $0x200] sm:$0xff] %v478
                  %v480 = vld [vmem:[%s348 + $0x398] sm:$0xff]
                  %481 = vst [vmem:[%s349 + $0x208] sm:$0xff] %v480
                  %v482 = vld [vmem:[%s348 + $0x3a0] sm:$0xff]
                  %483 = vst [vmem:[%s349 + $0x210] sm:$0xff] %v482
                  %v484 = vld [vmem:[%s348 + $0x3a8] sm:$0xff]
                  %485 = vst [vmem:[%s349 + $0x218] sm:$0xff] %v484
                  %v486 = vld [vmem:[%s348 + $0x3b0] sm:$0xff]
                  %487 = vst [vmem:[%s349 + $0x220] sm:$0xff] %v486
                  %v488 = vld [vmem:[%s348 + $0x3b8] sm:$0xff]
                  %489 = vst [vmem:[%s349 + $0x228] sm:$0xff] %v488
                  %v490 = vld [vmem:[%s348 + $0x3c0] sm:$0xff]
                  %491 = vst [vmem:[%s349 + $0x230] sm:$0xff] %v490
                  %v492 = vld [vmem:[%s348 + $0x3c8] sm:$0xff]
                  %493 = vst [vmem:[%s349 + $0x238] sm:$0xff] %v492
                  %v494 = vld [vmem:[%s348 + $0x3d0] sm:$0xff]
                  %495 = vst [vmem:[%s349 + $0x240] sm:$0xff] %v494
                  %v496 = vld [vmem:[%s348 + $0x3d8] sm:$0xff]
                  %497 = vst [vmem:[%s349 + $0x248] sm:$0xff] %v496
                  %v498 = vld [vmem:[%s348 + $0x3e0] sm:$0xff]
                  %499 = vst [vmem:[%s349 + $0x250] sm:$0xff] %v498
                $region56: #{m_forward.1} parent=50 // loop_footer
                  %s347 = sadd.s32 1, %s343
                $region57: #{m_forward.1} parent=50 // loop_footer_branch
                  %342 = sbr.rel target = $region53
                $region58: #{m_forward.1} parent=50 // loop_exit
                  _
              $region51: #{m_forward.1} parent=35 // pred_fallthru
                _
              // Predicated region
              $region59: #{m_forward.1} parent=35 // pred_check
                _
              $region60: #{m_forward.1} parent=35 // pred_check_branch
                %501 = sbr.rel target = $region62
              $region61: #{m_forward.1} parent=35 // pred_region
                _
              $region62: #{m_forward.1} parent=35 // pred_fallthru
                _
            $region36: #{m_forward.1} parent=31 // pred_fallthru
              _
            // Predicated region
            $region37: #{m_forward.1} parent=31 // pred_check
              _
            $region38: #{m_forward.1} parent=31 // pred_check_branch
              %179 = sbr.rel target = $region40
            $region39: #{m_forward.1} parent=31 // pred_region
              %s181 = ssub.s32 256, 1
              loop: start=0, step=1, limit=1
              $region41: #{m_forward.1} parent=39 // loop_pre_header
                _
              $region42: #{m_forward.1} parent=39 // loop_header
                %s183 = sphi 0, %s187
                %p184 = scmp.ge.s32.totalorder %s183, 1
                %s188 = sphi %s173, %s173
                %s189 = sphi %s170, %s170
              $region43: #{m_forward.1} parent=39 // loop_header_branch
                %186 = sbr.rel (%p184) target = $region47
              $region44: #{m_forward.1} parent=39 // loop_body
                %v190 = vld [vmem:[%s188] sm:%s181]
                %191 = vst [vmem:[%s189] sm:%s181] %v190
                %v192 = vld [vmem:[%s188 + $0x8] sm:%s181]
                %193 = vst [vmem:[%s189 + $0x8] sm:%s181] %v192
                %v194 = vld [vmem:[%s188 + $0x10] sm:%s181]
                %195 = vst [vmem:[%s189 + $0x10] sm:%s181] %v194
                %v196 = vld [vmem:[%s188 + $0x18] sm:%s181]
                %197 = vst [vmem:[%s189 + $0x18] sm:%s181] %v196
                %v198 = vld [vmem:[%s188 + $0x20] sm:%s181]
                %199 = vst [vmem:[%s189 + $0x20] sm:%s181] %v198
                %v200 = vld [vmem:[%s188 + $0x28] sm:%s181]
                %201 = vst [vmem:[%s189 + $0x28] sm:%s181] %v200
                %v202 = vld [vmem:[%s188 + $0x30] sm:%s181]
                %203 = vst [vmem:[%s189 + $0x30] sm:%s181] %v202
                %v204 = vld [vmem:[%s188 + $0x38] sm:%s181]
                %205 = vst [vmem:[%s189 + $0x38] sm:%s181] %v204
                %v206 = vld [vmem:[%s188 + $0x40] sm:%s181]
                %207 = vst [vmem:[%s189 + $0x40] sm:%s181] %v206
                %v208 = vld [vmem:[%s188 + $0x48] sm:%s181]
                %209 = vst [vmem:[%s189 + $0x48] sm:%s181] %v208
                %v210 = vld [vmem:[%s188 + $0x50] sm:%s181]
                %211 = vst [vmem:[%s189 + $0x50] sm:%s181] %v210
                %v212 = vld [vmem:[%s188 + $0x58] sm:%s181]
                %213 = vst [vmem:[%s189 + $0x58] sm:%s181] %v212
                %v214 = vld [vmem:[%s188 + $0x60] sm:%s181]
                %215 = vst [vmem:[%s189 + $0x60] sm:%s181] %v214
                %v216 = vld [vmem:[%s188 + $0x68] sm:%s181]
                %217 = vst [vmem:[%s189 + $0x68] sm:%s181] %v216
                %v218 = vld [vmem:[%s188 + $0x70] sm:%s181]
                %219 = vst [vmem:[%s189 + $0x70] sm:%s181] %v218
                %v220 = vld [vmem:[%s188 + $0x78] sm:%s181]
                %221 = vst [vmem:[%s189 + $0x78] sm:%s181] %v220
                %v222 = vld [vmem:[%s188 + $0x80] sm:%s181]
                %223 = vst [vmem:[%s189 + $0x80] sm:%s181] %v222
                %v224 = vld [vmem:[%s188 + $0x88] sm:%s181]
                %225 = vst [vmem:[%s189 + $0x88] sm:%s181] %v224
                %v226 = vld [vmem:[%s188 + $0x90] sm:%s181]
                %227 = vst [vmem:[%s189 + $0x90] sm:%s181] %v226
                %v228 = vld [vmem:[%s188 + $0x98] sm:%s181]
                %229 = vst [vmem:[%s189 + $0x98] sm:%s181] %v228
                %v230 = vld [vmem:[%s188 + $0xa0] sm:%s181]
                %231 = vst [vmem:[%s189 + $0xa0] sm:%s181] %v230
                %v232 = vld [vmem:[%s188 + $0xa8] sm:%s181]
                %233 = vst [vmem:[%s189 + $0xa8] sm:%s181] %v232
                %v234 = vld [vmem:[%s188 + $0xb0] sm:%s181]
                %235 = vst [vmem:[%s189 + $0xb0] sm:%s181] %v234
                %v236 = vld [vmem:[%s188 + $0xb8] sm:%s181]
                %237 = vst [vmem:[%s189 + $0xb8] sm:%s181] %v236
                %v238 = vld [vmem:[%s188 + $0xc0] sm:%s181]
                %239 = vst [vmem:[%s189 + $0xc0] sm:%s181] %v238
                %v240 = vld [vmem:[%s188 + $0x190] sm:%s181]
                %241 = vst [vmem:[%s189 + $0xc8] sm:%s181] %v240
                %v242 = vld [vmem:[%s188 + $0x198] sm:%s181]
                %243 = vst [vmem:[%s189 + $0xd0] sm:%s181] %v242
                %v244 = vld [vmem:[%s188 + $0x1a0] sm:%s181]
                %245 = vst [vmem:[%s189 + $0xd8] sm:%s181] %v244
                %v246 = vld [vmem:[%s188 + $0x1a8] sm:%s181]
                %247 = vst [vmem:[%s189 + $0xe0] sm:%s181] %v246
                %v248 = vld [vmem:[%s188 + $0x1b0] sm:%s181]
                %249 = vst [vmem:[%s189 + $0xe8] sm:%s181] %v248
                %v250 = vld [vmem:[%s188 + $0x1b8] sm:%s181]
                %251 = vst [vmem:[%s189 + $0xf0] sm:%s181] %v250
                %v252 = vld [vmem:[%s188 + $0x1c0] sm:%s181]
                %253 = vst [vmem:[%s189 + $0xf8] sm:%s181] %v252
                %v254 = vld [vmem:[%s188 + $0x1c8] sm:%s181]
                %255 = vst [vmem:[%s189 + $0x100] sm:%s181] %v254
                %v256 = vld [vmem:[%s188 + $0x1d0] sm:%s181]
                %257 = vst [vmem:[%s189 + $0x108] sm:%s181] %v256
                %v258 = vld [vmem:[%s188 + $0x1d8] sm:%s181]
                %259 = vst [vmem:[%s189 + $0x110] sm:%s181] %v258
                %v260 = vld [vmem:[%s188 + $0x1e0] sm:%s181]
                %261 = vst [vmem:[%s189 + $0x118] sm:%s181] %v260
                %v262 = vld [vmem:[%s188 + $0x1e8] sm:%s181]
                %263 = vst [vmem:[%s189 + $0x120] sm:%s181] %v262
                %v264 = vld [vmem:[%s188 + $0x1f0] sm:%s181]
                %265 = vst [vmem:[%s189 + $0x128] sm:%s181] %v264
                %v266 = vld [vmem:[%s188 + $0x1f8] sm:%s181]
                %267 = vst [vmem:[%s189 + $0x130] sm:%s181] %v266
                %v268 = vld [vmem:[%s188 + $0x200] sm:%s181]
                %269 = vst [vmem:[%s189 + $0x138] sm:%s181] %v268
                %v270 = vld [vmem:[%s188 + $0x208] sm:%s181]
                %271 = vst [vmem:[%s189 + $0x140] sm:%s181] %v270
                %v272 = vld [vmem:[%s188 + $0x210] sm:%s181]
                %273 = vst [vmem:[%s189 + $0x148] sm:%s181] %v272
                %v274 = vld [vmem:[%s188 + $0x218] sm:%s181]
                %275 = vst [vmem:[%s189 + $0x150] sm:%s181] %v274
                %v276 = vld [vmem:[%s188 + $0x220] sm:%s181]
                %277 = vst [vmem:[%s189 + $0x158] sm:%s181] %v276
                %v278 = vld [vmem:[%s188 + $0x228] sm:%s181]
                %279 = vst [vmem:[%s189 + $0x160] sm:%s181] %v278
                %v280 = vld [vmem:[%s188 + $0x230] sm:%s181]
                %281 = vst [vmem:[%s189 + $0x168] sm:%s181] %v280
                %v282 = vld [vmem:[%s188 + $0x238] sm:%s181]
                %283 = vst [vmem:[%s189 + $0x170] sm:%s181] %v282
                %v284 = vld [vmem:[%s188 + $0x240] sm:%s181]
                %285 = vst [vmem:[%s189 + $0x178] sm:%s181] %v284
                %v286 = vld [vmem:[%s188 + $0x248] sm:%s181]
                %287 = vst [vmem:[%s189 + $0x180] sm:%s181] %v286
                %v288 = vld [vmem:[%s188 + $0x250] sm:%s181]
                %289 = vst [vmem:[%s189 + $0x188] sm:%s181] %v288
                %v290 = vld [vmem:[%s188 + $0x320] sm:%s181]
                %291 = vst [vmem:[%s189 + $0x190] sm:%s181] %v290
                %v292 = vld [vmem:[%s188 + $0x328] sm:%s181]
                %293 = vst [vmem:[%s189 + $0x198] sm:%s181] %v292
                %v294 = vld [vmem:[%s188 + $0x330] sm:%s181]
                %295 = vst [vmem:[%s189 + $0x1a0] sm:%s181] %v294
                %v296 = vld [vmem:[%s188 + $0x338] sm:%s181]
                %297 = vst [vmem:[%s189 + $0x1a8] sm:%s181] %v296
                %v298 = vld [vmem:[%s188 + $0x340] sm:%s181]
                %299 = vst [vmem:[%s189 + $0x1b0] sm:%s181] %v298
                %v300 = vld [vmem:[%s188 + $0x348] sm:%s181]
                %301 = vst [vmem:[%s189 + $0x1b8] sm:%s181] %v300
                %v302 = vld [vmem:[%s188 + $0x350] sm:%s181]
                %303 = vst [vmem:[%s189 + $0x1c0] sm:%s181] %v302
                %v304 = vld [vmem:[%s188 + $0x358] sm:%s181]
                %305 = vst [vmem:[%s189 + $0x1c8] sm:%s181] %v304
                %v306 = vld [vmem:[%s188 + $0x360] sm:%s181]
                %307 = vst [vmem:[%s189 + $0x1d0] sm:%s181] %v306
                %v308 = vld [vmem:[%s188 + $0x368] sm:%s181]
                %309 = vst [vmem:[%s189 + $0x1d8] sm:%s181] %v308
                %v310 = vld [vmem:[%s188 + $0x370] sm:%s181]
                %311 = vst [vmem:[%s189 + $0x1e0] sm:%s181] %v310
                %v312 = vld [vmem:[%s188 + $0x378] sm:%s181]
                %313 = vst [vmem:[%s189 + $0x1e8] sm:%s181] %v312
                %v314 = vld [vmem:[%s188 + $0x380] sm:%s181]
                %315 = vst [vmem:[%s189 + $0x1f0] sm:%s181] %v314
                %v316 = vld [vmem:[%s188 + $0x388] sm:%s181]
                %317 = vst [vmem:[%s189 + $0x1f8] sm:%s181] %v316
                %v318 = vld [vmem:[%s188 + $0x390] sm:%s181]
                %319 = vst [vmem:[%s189 + $0x200] sm:%s181] %v318
                %v320 = vld [vmem:[%s188 + $0x398] sm:%s181]
                %321 = vst [vmem:[%s189 + $0x208] sm:%s181] %v320
                %v322 = vld [vmem:[%s188 + $0x3a0] sm:%s181]
                %323 = vst [vmem:[%s189 + $0x210] sm:%s181] %v322
                %v324 = vld [vmem:[%s188 + $0x3a8] sm:%s181]
                %325 = vst [vmem:[%s189 + $0x218] sm:%s181] %v324
                %v326 = vld [vmem:[%s188 + $0x3b0] sm:%s181]
                %327 = vst [vmem:[%s189 + $0x220] sm:%s181] %v326
                %v328 = vld [vmem:[%s188 + $0x3b8] sm:%s181]
                %329 = vst [vmem:[%s189 + $0x228] sm:%s181] %v328
                %v330 = vld [vmem:[%s188 + $0x3c0] sm:%s181]
                %331 = vst [vmem:[%s189 + $0x230] sm:%s181] %v330
                %v332 = vld [vmem:[%s188 + $0x3c8] sm:%s181]
                %333 = vst [vmem:[%s189 + $0x238] sm:%s181] %v332
                %v334 = vld [vmem:[%s188 + $0x3d0] sm:%s181]
                %335 = vst [vmem:[%s189 + $0x240] sm:%s181] %v334
                %v336 = vld [vmem:[%s188 + $0x3d8] sm:%s181]
                %337 = vst [vmem:[%s189 + $0x248] sm:%s181] %v336
                %v338 = vld [vmem:[%s188 + $0x3e0] sm:%s181]
                %339 = vst [vmem:[%s189 + $0x250] sm:%s181] %v338
              $region45: #{m_forward.1} parent=39 // loop_footer
                %s187 = sadd.s32 1, %s183
              $region46: #{m_forward.1} parent=39 // loop_footer_branch
                %182 = sbr.rel target = $region42
              $region47: #{m_forward.1} parent=39 // loop_exit
                _
            $region40: #{m_forward.1} parent=31 // pred_fallthru
              _
          $region32: #{m_forward.1} parent=27 // pred_fallthru
            _
          %502 = vnop
        $region28: #{m_forward.1} parent=23 // pred_fallthru
          _
        // Predicated region
        $region63: #{m_forward.1} parent=23 // pred_check
          %p503 = pneg %p100
        $region64: #{m_forward.1} parent=23 // pred_check_branch
          %505 = sbr.rel (%p503) target = $region66
        $region65: #{m_forward.1} parent=23 // pred_region
          %s506 = sand.u32 %s90, 1
          %s507 = sand.u32 %s90, 1
          %s508 = smul.addr %s507, 1000
          %s509 = scalar_lea.vmem [#allocation6], %s508
          %s510 = smul.addr %s12, 25
          %s511 = smul.addr %s510, 8
          %s512 = scalar_lea.vmem %s3, %s511
          // Predicated region
          $region67: #{m_forward.1} parent=65 // pred_check
            _
          $region68: #{m_forward.1} parent=65 // pred_check_branch
            %514 = sbr.rel (0) target = $region70
          $region69: #{m_forward.1} parent=65 // pred_region
            // Predicated region
            $region71: #{m_forward.1} parent=69 // pred_check
              _
            $region72: #{m_forward.1} parent=69 // pred_check_branch
              %516 = sbr.rel (0) target = $region74
            $region73: #{m_forward.1} parent=69 // pred_region
              // Predicated region
              $region86: #{m_forward.1} parent=73 // pred_check
                _
              $region87: #{m_forward.1} parent=73 // pred_check_branch
                %780 = sbr.rel (0) target = $region89
              $region88: #{m_forward.1} parent=73 // pred_region
                loop: start=0, step=1, limit=1
                $region90: #{m_forward.1} parent=88 // loop_pre_header
                  _
                $region91: #{m_forward.1} parent=88 // loop_header
                  %s782 = sphi 0, %s786
                  %p783 = scmp.ge.s32.totalorder %s782, 1
                  %s787 = sphi %s512, %s512
                  %s788 = sphi %s509, %s509
                $region92: #{m_forward.1} parent=88 // loop_header_branch
                  %785 = sbr.rel (%p783) target = $region96
                $region93: #{m_forward.1} parent=88 // loop_body
                  %v789 = vld [vmem:[%s787] sm:$0xff]
                  %790 = vst [vmem:[%s788] sm:$0xff] %v789
                  %v791 = vld [vmem:[%s787 + $0x8] sm:$0xff]
                  %792 = vst [vmem:[%s788 + $0x8] sm:$0xff] %v791
                  %v793 = vld [vmem:[%s787 + $0x10] sm:$0xff]
                  %794 = vst [vmem:[%s788 + $0x10] sm:$0xff] %v793
                  %v795 = vld [vmem:[%s787 + $0x18] sm:$0xff]
                  %796 = vst [vmem:[%s788 + $0x18] sm:$0xff] %v795
                  %v797 = vld [vmem:[%s787 + $0x20] sm:$0xff]
                  %798 = vst [vmem:[%s788 + $0x20] sm:$0xff] %v797
                  %v799 = vld [vmem:[%s787 + $0x28] sm:$0xff]
                  %800 = vst [vmem:[%s788 + $0x28] sm:$0xff] %v799
                  %v801 = vld [vmem:[%s787 + $0x30] sm:$0xff]
                  %802 = vst [vmem:[%s788 + $0x30] sm:$0xff] %v801
                  %v803 = vld [vmem:[%s787 + $0x38] sm:$0xff]
                  %804 = vst [vmem:[%s788 + $0x38] sm:$0xff] %v803
                  %v805 = vld [vmem:[%s787 + $0x40] sm:$0xff]
                  %806 = vst [vmem:[%s788 + $0x40] sm:$0xff] %v805
                  %v807 = vld [vmem:[%s787 + $0x48] sm:$0xff]
                  %808 = vst [vmem:[%s788 + $0x48] sm:$0xff] %v807
                  %v809 = vld [vmem:[%s787 + $0x50] sm:$0xff]
                  %810 = vst [vmem:[%s788 + $0x50] sm:$0xff] %v809
                  %v811 = vld [vmem:[%s787 + $0x58] sm:$0xff]
                  %812 = vst [vmem:[%s788 + $0x58] sm:$0xff] %v811
                  %v813 = vld [vmem:[%s787 + $0x60] sm:$0xff]
                  %814 = vst [vmem:[%s788 + $0x60] sm:$0xff] %v813
                  %v815 = vld [vmem:[%s787 + $0x68] sm:$0xff]
                  %816 = vst [vmem:[%s788 + $0x68] sm:$0xff] %v815
                  %v817 = vld [vmem:[%s787 + $0x70] sm:$0xff]
                  %818 = vst [vmem:[%s788 + $0x70] sm:$0xff] %v817
                  %v819 = vld [vmem:[%s787 + $0x78] sm:$0xff]
                  %820 = vst [vmem:[%s788 + $0x78] sm:$0xff] %v819
                  %v821 = vld [vmem:[%s787 + $0x80] sm:$0xff]
                  %822 = vst [vmem:[%s788 + $0x80] sm:$0xff] %v821
                  %v823 = vld [vmem:[%s787 + $0x88] sm:$0xff]
                  %824 = vst [vmem:[%s788 + $0x88] sm:$0xff] %v823
                  %v825 = vld [vmem:[%s787 + $0x90] sm:$0xff]
                  %826 = vst [vmem:[%s788 + $0x90] sm:$0xff] %v825
                  %v827 = vld [vmem:[%s787 + $0x98] sm:$0xff]
                  %828 = vst [vmem:[%s788 + $0x98] sm:$0xff] %v827
                  %v829 = vld [vmem:[%s787 + $0xa0] sm:$0xff]
                  %830 = vst [vmem:[%s788 + $0xa0] sm:$0xff] %v829
                  %v831 = vld [vmem:[%s787 + $0xa8] sm:$0xff]
                  %832 = vst [vmem:[%s788 + $0xa8] sm:$0xff] %v831
                  %v833 = vld [vmem:[%s787 + $0xb0] sm:$0xff]
                  %834 = vst [vmem:[%s788 + $0xb0] sm:$0xff] %v833
                  %v835 = vld [vmem:[%s787 + $0xb8] sm:$0xff]
                  %836 = vst [vmem:[%s788 + $0xb8] sm:$0xff] %v835
                  %v837 = vld [vmem:[%s787 + $0xc0] sm:$0xff]
                  %838 = vst [vmem:[%s788 + $0xc0] sm:$0xff] %v837
                  %v839 = vld [vmem:[%s787 + $0x190] sm:$0xff]
                  %840 = vst [vmem:[%s788 + $0xc8] sm:$0xff] %v839
                  %v841 = vld [vmem:[%s787 + $0x198] sm:$0xff]
                  %842 = vst [vmem:[%s788 + $0xd0] sm:$0xff] %v841
                  %v843 = vld [vmem:[%s787 + $0x1a0] sm:$0xff]
                  %844 = vst [vmem:[%s788 + $0xd8] sm:$0xff] %v843
                  %v845 = vld [vmem:[%s787 + $0x1a8] sm:$0xff]
                  %846 = vst [vmem:[%s788 + $0xe0] sm:$0xff] %v845
                  %v847 = vld [vmem:[%s787 + $0x1b0] sm:$0xff]
                  %848 = vst [vmem:[%s788 + $0xe8] sm:$0xff] %v847
                  %v849 = vld [vmem:[%s787 + $0x1b8] sm:$0xff]
                  %850 = vst [vmem:[%s788 + $0xf0] sm:$0xff] %v849
                  %v851 = vld [vmem:[%s787 + $0x1c0] sm:$0xff]
                  %852 = vst [vmem:[%s788 + $0xf8] sm:$0xff] %v851
                  %v853 = vld [vmem:[%s787 + $0x1c8] sm:$0xff]
                  %854 = vst [vmem:[%s788 + $0x100] sm:$0xff] %v853
                  %v855 = vld [vmem:[%s787 + $0x1d0] sm:$0xff]
                  %856 = vst [vmem:[%s788 + $0x108] sm:$0xff] %v855
                  %v857 = vld [vmem:[%s787 + $0x1d8] sm:$0xff]
                  %858 = vst [vmem:[%s788 + $0x110] sm:$0xff] %v857
                  %v859 = vld [vmem:[%s787 + $0x1e0] sm:$0xff]
                  %860 = vst [vmem:[%s788 + $0x118] sm:$0xff] %v859
                  %v861 = vld [vmem:[%s787 + $0x1e8] sm:$0xff]
                  %862 = vst [vmem:[%s788 + $0x120] sm:$0xff] %v861
                  %v863 = vld [vmem:[%s787 + $0x1f0] sm:$0xff]
                  %864 = vst [vmem:[%s788 + $0x128] sm:$0xff] %v863
                  %v865 = vld [vmem:[%s787 + $0x1f8] sm:$0xff]
                  %866 = vst [vmem:[%s788 + $0x130] sm:$0xff] %v865
                  %v867 = vld [vmem:[%s787 + $0x200] sm:$0xff]
                  %868 = vst [vmem:[%s788 + $0x138] sm:$0xff] %v867
                  %v869 = vld [vmem:[%s787 + $0x208] sm:$0xff]
                  %870 = vst [vmem:[%s788 + $0x140] sm:$0xff] %v869
                  %v871 = vld [vmem:[%s787 + $0x210] sm:$0xff]
                  %872 = vst [vmem:[%s788 + $0x148] sm:$0xff] %v871
                  %v873 = vld [vmem:[%s787 + $0x218] sm:$0xff]
                  %874 = vst [vmem:[%s788 + $0x150] sm:$0xff] %v873
                  %v875 = vld [vmem:[%s787 + $0x220] sm:$0xff]
                  %876 = vst [vmem:[%s788 + $0x158] sm:$0xff] %v875
                  %v877 = vld [vmem:[%s787 + $0x228] sm:$0xff]
                  %878 = vst [vmem:[%s788 + $0x160] sm:$0xff] %v877
                  %v879 = vld [vmem:[%s787 + $0x230] sm:$0xff]
                  %880 = vst [vmem:[%s788 + $0x168] sm:$0xff] %v879
                  %v881 = vld [vmem:[%s787 + $0x238] sm:$0xff]
                  %882 = vst [vmem:[%s788 + $0x170] sm:$0xff] %v881
                  %v883 = vld [vmem:[%s787 + $0x240] sm:$0xff]
                  %884 = vst [vmem:[%s788 + $0x178] sm:$0xff] %v883
                  %v885 = vld [vmem:[%s787 + $0x248] sm:$0xff]
                  %886 = vst [vmem:[%s788 + $0x180] sm:$0xff] %v885
                  %v887 = vld [vmem:[%s787 + $0x250] sm:$0xff]
                  %888 = vst [vmem:[%s788 + $0x188] sm:$0xff] %v887
                  %v889 = vld [vmem:[%s787 + $0x320] sm:$0xff]
                  %890 = vst [vmem:[%s788 + $0x190] sm:$0xff] %v889
                  %v891 = vld [vmem:[%s787 + $0x328] sm:$0xff]
                  %892 = vst [vmem:[%s788 + $0x198] sm:$0xff] %v891
                  %v893 = vld [vmem:[%s787 + $0x330] sm:$0xff]
                  %894 = vst [vmem:[%s788 + $0x1a0] sm:$0xff] %v893
                  %v895 = vld [vmem:[%s787 + $0x338] sm:$0xff]
                  %896 = vst [vmem:[%s788 + $0x1a8] sm:$0xff] %v895
                  %v897 = vld [vmem:[%s787 + $0x340] sm:$0xff]
                  %898 = vst [vmem:[%s788 + $0x1b0] sm:$0xff] %v897
                  %v899 = vld [vmem:[%s787 + $0x348] sm:$0xff]
                  %900 = vst [vmem:[%s788 + $0x1b8] sm:$0xff] %v899
                  %v901 = vld [vmem:[%s787 + $0x350] sm:$0xff]
                  %902 = vst [vmem:[%s788 + $0x1c0] sm:$0xff] %v901
                  %v903 = vld [vmem:[%s787 + $0x358] sm:$0xff]
                  %904 = vst [vmem:[%s788 + $0x1c8] sm:$0xff] %v903
                  %v905 = vld [vmem:[%s787 + $0x360] sm:$0xff]
                  %906 = vst [vmem:[%s788 + $0x1d0] sm:$0xff] %v905
                  %v907 = vld [vmem:[%s787 + $0x368] sm:$0xff]
                  %908 = vst [vmem:[%s788 + $0x1d8] sm:$0xff] %v907
                  %v909 = vld [vmem:[%s787 + $0x370] sm:$0xff]
                  %910 = vst [vmem:[%s788 + $0x1e0] sm:$0xff] %v909
                  %v911 = vld [vmem:[%s787 + $0x378] sm:$0xff]
                  %912 = vst [vmem:[%s788 + $0x1e8] sm:$0xff] %v911
                  %v913 = vld [vmem:[%s787 + $0x380] sm:$0xff]
                  %914 = vst [vmem:[%s788 + $0x1f0] sm:$0xff] %v913
                  %v915 = vld [vmem:[%s787 + $0x388] sm:$0xff]
                  %916 = vst [vmem:[%s788 + $0x1f8] sm:$0xff] %v915
                  %v917 = vld [vmem:[%s787 + $0x390] sm:$0xff]
                  %918 = vst [vmem:[%s788 + $0x200] sm:$0xff] %v917
                  %v919 = vld [vmem:[%s787 + $0x398] sm:$0xff]
                  %920 = vst [vmem:[%s788 + $0x208] sm:$0xff] %v919
                  %v921 = vld [vmem:[%s787 + $0x3a0] sm:$0xff]
                  %922 = vst [vmem:[%s788 + $0x210] sm:$0xff] %v921
                  %v923 = vld [vmem:[%s787 + $0x3a8] sm:$0xff]
                  %924 = vst [vmem:[%s788 + $0x218] sm:$0xff] %v923
                  %v925 = vld [vmem:[%s787 + $0x3b0] sm:$0xff]
                  %926 = vst [vmem:[%s788 + $0x220] sm:$0xff] %v925
                  %v927 = vld [vmem:[%s787 + $0x3b8] sm:$0xff]
                  %928 = vst [vmem:[%s788 + $0x228] sm:$0xff] %v927
                  %v929 = vld [vmem:[%s787 + $0x3c0] sm:$0xff]
                  %930 = vst [vmem:[%s788 + $0x230] sm:$0xff] %v929
                  %v931 = vld [vmem:[%s787 + $0x3c8] sm:$0xff]
                  %932 = vst [vmem:[%s788 + $0x238] sm:$0xff] %v931
                  %v933 = vld [vmem:[%s787 + $0x3d0] sm:$0xff]
                  %934 = vst [vmem:[%s788 + $0x240] sm:$0xff] %v933
                  %v935 = vld [vmem:[%s787 + $0x3d8] sm:$0xff]
                  %936 = vst [vmem:[%s788 + $0x248] sm:$0xff] %v935
                  %v937 = vld [vmem:[%s787 + $0x3e0] sm:$0xff]
                  %938 = vst [vmem:[%s788 + $0x250] sm:$0xff] %v937
                  %v939 = vld [vmem:[%s787 + $0x4b0] sm:$0xff]
                  %940 = vst [vmem:[%s788 + $0x258] sm:$0xff] %v939
                  %v941 = vld [vmem:[%s787 + $0x4b8] sm:$0xff]
                  %942 = vst [vmem:[%s788 + $0x260] sm:$0xff] %v941
                  %v943 = vld [vmem:[%s787 + $0x4c0] sm:$0xff]
                  %944 = vst [vmem:[%s788 + $0x268] sm:$0xff] %v943
                  %v945 = vld [vmem:[%s787 + $0x4c8] sm:$0xff]
                  %946 = vst [vmem:[%s788 + $0x270] sm:$0xff] %v945
                  %v947 = vld [vmem:[%s787 + $0x4d0] sm:$0xff]
                  %948 = vst [vmem:[%s788 + $0x278] sm:$0xff] %v947
                  %v949 = vld [vmem:[%s787 + $0x4d8] sm:$0xff]
                  %950 = vst [vmem:[%s788 + $0x280] sm:$0xff] %v949
                  %v951 = vld [vmem:[%s787 + $0x4e0] sm:$0xff]
                  %952 = vst [vmem:[%s788 + $0x288] sm:$0xff] %v951
                  %v953 = vld [vmem:[%s787 + $0x4e8] sm:$0xff]
                  %954 = vst [vmem:[%s788 + $0x290] sm:$0xff] %v953
                  %v955 = vld [vmem:[%s787 + $0x4f0] sm:$0xff]
                  %956 = vst [vmem:[%s788 + $0x298] sm:$0xff] %v955
                  %v957 = vld [vmem:[%s787 + $0x4f8] sm:$0xff]
                  %958 = vst [vmem:[%s788 + $0x2a0] sm:$0xff] %v957
                  %v959 = vld [vmem:[%s787 + $0x500] sm:$0xff]
                  %960 = vst [vmem:[%s788 + $0x2a8] sm:$0xff] %v959
                  %v961 = vld [vmem:[%s787 + $0x508] sm:$0xff]
                  %962 = vst [vmem:[%s788 + $0x2b0] sm:$0xff] %v961
                  %v963 = vld [vmem:[%s787 + $0x510] sm:$0xff]
                  %964 = vst [vmem:[%s788 + $0x2b8] sm:$0xff] %v963
                  %v965 = vld [vmem:[%s787 + $0x518] sm:$0xff]
                  %966 = vst [vmem:[%s788 + $0x2c0] sm:$0xff] %v965
                  %v967 = vld [vmem:[%s787 + $0x520] sm:$0xff]
                  %968 = vst [vmem:[%s788 + $0x2c8] sm:$0xff] %v967
                  %v969 = vld [vmem:[%s787 + $0x528] sm:$0xff]
                  %970 = vst [vmem:[%s788 + $0x2d0] sm:$0xff] %v969
                  %v971 = vld [vmem:[%s787 + $0x530] sm:$0xff]
                  %972 = vst [vmem:[%s788 + $0x2d8] sm:$0xff] %v971
                  %v973 = vld [vmem:[%s787 + $0x538] sm:$0xff]
                  %974 = vst [vmem:[%s788 + $0x2e0] sm:$0xff] %v973
                  %v975 = vld [vmem:[%s787 + $0x540] sm:$0xff]
                  %976 = vst [vmem:[%s788 + $0x2e8] sm:$0xff] %v975
                  %v977 = vld [vmem:[%s787 + $0x548] sm:$0xff]
                  %978 = vst [vmem:[%s788 + $0x2f0] sm:$0xff] %v977
                  %v979 = vld [vmem:[%s787 + $0x550] sm:$0xff]
                  %980 = vst [vmem:[%s788 + $0x2f8] sm:$0xff] %v979
                  %v981 = vld [vmem:[%s787 + $0x558] sm:$0xff]
                  %982 = vst [vmem:[%s788 + $0x300] sm:$0xff] %v981
                  %v983 = vld [vmem:[%s787 + $0x560] sm:$0xff]
                  %984 = vst [vmem:[%s788 + $0x308] sm:$0xff] %v983
                  %v985 = vld [vmem:[%s787 + $0x568] sm:$0xff]
                  %986 = vst [vmem:[%s788 + $0x310] sm:$0xff] %v985
                  %v987 = vld [vmem:[%s787 + $0x570] sm:$0xff]
                  %988 = vst [vmem:[%s788 + $0x318] sm:$0xff] %v987
                  %v989 = vld [vmem:[%s787 + $0x640] sm:$0xff]
                  %990 = vst [vmem:[%s788 + $0x320] sm:$0xff] %v989
                  %v991 = vld [vmem:[%s787 + $0x648] sm:$0xff]
                  %992 = vst [vmem:[%s788 + $0x328] sm:$0xff] %v991
                  %v993 = vld [vmem:[%s787 + $0x650] sm:$0xff]
                  %994 = vst [vmem:[%s788 + $0x330] sm:$0xff] %v993
                  %v995 = vld [vmem:[%s787 + $0x658] sm:$0xff]
                  %996 = vst [vmem:[%s788 + $0x338] sm:$0xff] %v995
                  %v997 = vld [vmem:[%s787 + $0x660] sm:$0xff]
                  %998 = vst [vmem:[%s788 + $0x340] sm:$0xff] %v997
                  %v999 = vld [vmem:[%s787 + $0x668] sm:$0xff]
                  %1000 = vst [vmem:[%s788 + $0x348] sm:$0xff] %v999
                  %v1001 = vld [vmem:[%s787 + $0x670] sm:$0xff]
                  %1002 = vst [vmem:[%s788 + $0x350] sm:$0xff] %v1001
                  %v1003 = vld [vmem:[%s787 + $0x678] sm:$0xff]
                  %1004 = vst [vmem:[%s788 + $0x358] sm:$0xff] %v1003
                  %v1005 = vld [vmem:[%s787 + $0x680] sm:$0xff]
                  %1006 = vst [vmem:[%s788 + $0x360] sm:$0xff] %v1005
                  %v1007 = vld [vmem:[%s787 + $0x688] sm:$0xff]
                  %1008 = vst [vmem:[%s788 + $0x368] sm:$0xff] %v1007
                  %v1009 = vld [vmem:[%s787 + $0x690] sm:$0xff]
                  %1010 = vst [vmem:[%s788 + $0x370] sm:$0xff] %v1009
                  %v1011 = vld [vmem:[%s787 + $0x698] sm:$0xff]
                  %1012 = vst [vmem:[%s788 + $0x378] sm:$0xff] %v1011
                  %v1013 = vld [vmem:[%s787 + $0x6a0] sm:$0xff]
                  %1014 = vst [vmem:[%s788 + $0x380] sm:$0xff] %v1013
                  %v1015 = vld [vmem:[%s787 + $0x6a8] sm:$0xff]
                  %1016 = vst [vmem:[%s788 + $0x388] sm:$0xff] %v1015
                  %v1017 = vld [vmem:[%s787 + $0x6b0] sm:$0xff]
                  %1018 = vst [vmem:[%s788 + $0x390] sm:$0xff] %v1017
                  %v1019 = vld [vmem:[%s787 + $0x6b8] sm:$0xff]
                  %1020 = vst [vmem:[%s788 + $0x398] sm:$0xff] %v1019
                  %v1021 = vld [vmem:[%s787 + $0x6c0] sm:$0xff]
                  %1022 = vst [vmem:[%s788 + $0x3a0] sm:$0xff] %v1021
                  %v1023 = vld [vmem:[%s787 + $0x6c8] sm:$0xff]
                  %1024 = vst [vmem:[%s788 + $0x3a8] sm:$0xff] %v1023
                  %v1025 = vld [vmem:[%s787 + $0x6d0] sm:$0xff]
                  %1026 = vst [vmem:[%s788 + $0x3b0] sm:$0xff] %v1025
                  %v1027 = vld [vmem:[%s787 + $0x6d8] sm:$0xff]
                  %1028 = vst [vmem:[%s788 + $0x3b8] sm:$0xff] %v1027
                  %v1029 = vld [vmem:[%s787 + $0x6e0] sm:$0xff]
                  %1030 = vst [vmem:[%s788 + $0x3c0] sm:$0xff] %v1029
                  %v1031 = vld [vmem:[%s787 + $0x6e8] sm:$0xff]
                  %1032 = vst [vmem:[%s788 + $0x3c8] sm:$0xff] %v1031
                  %v1033 = vld [vmem:[%s787 + $0x6f0] sm:$0xff]
                  %1034 = vst [vmem:[%s788 + $0x3d0] sm:$0xff] %v1033
                  %v1035 = vld [vmem:[%s787 + $0x6f8] sm:$0xff]
                  %1036 = vst [vmem:[%s788 + $0x3d8] sm:$0xff] %v1035
                  %v1037 = vld [vmem:[%s787 + $0x700] sm:$0xff]
                  %1038 = vst [vmem:[%s788 + $0x3e0] sm:$0xff] %v1037
                $region94: #{m_forward.1} parent=88 // loop_footer
                  %s786 = sadd.s32 1, %s782
                $region95: #{m_forward.1} parent=88 // loop_footer_branch
                  %781 = sbr.rel target = $region91
                $region96: #{m_forward.1} parent=88 // loop_exit
                  _
              $region89: #{m_forward.1} parent=73 // pred_fallthru
                _
              // Predicated region
              $region97: #{m_forward.1} parent=73 // pred_check
                _
              $region98: #{m_forward.1} parent=73 // pred_check_branch
                %1040 = sbr.rel target = $region100
              $region99: #{m_forward.1} parent=73 // pred_region
                _
              $region100: #{m_forward.1} parent=73 // pred_fallthru
                _
            $region74: #{m_forward.1} parent=69 // pred_fallthru
              _
            // Predicated region
            $region75: #{m_forward.1} parent=69 // pred_check
              _
            $region76: #{m_forward.1} parent=69 // pred_check_branch
              %518 = sbr.rel target = $region78
            $region77: #{m_forward.1} parent=69 // pred_region
              %s520 = ssub.s32 256, 1
              loop: start=0, step=1, limit=1
              $region79: #{m_forward.1} parent=77 // loop_pre_header
                _
              $region80: #{m_forward.1} parent=77 // loop_header
                %s522 = sphi 0, %s526
                %p523 = scmp.ge.s32.totalorder %s522, 1
                %s527 = sphi %s512, %s512
                %s528 = sphi %s509, %s509
              $region81: #{m_forward.1} parent=77 // loop_header_branch
                %525 = sbr.rel (%p523) target = $region85
              $region82: #{m_forward.1} parent=77 // loop_body
                %v529 = vld [vmem:[%s527] sm:%s520]
                %530 = vst [vmem:[%s528] sm:%s520] %v529
                %v531 = vld [vmem:[%s527 + $0x8] sm:%s520]
                %532 = vst [vmem:[%s528 + $0x8] sm:%s520] %v531
                %v533 = vld [vmem:[%s527 + $0x10] sm:%s520]
                %534 = vst [vmem:[%s528 + $0x10] sm:%s520] %v533
                %v535 = vld [vmem:[%s527 + $0x18] sm:%s520]
                %536 = vst [vmem:[%s528 + $0x18] sm:%s520] %v535
                %v537 = vld [vmem:[%s527 + $0x20] sm:%s520]
                %538 = vst [vmem:[%s528 + $0x20] sm:%s520] %v537
                %v539 = vld [vmem:[%s527 + $0x28] sm:%s520]
                %540 = vst [vmem:[%s528 + $0x28] sm:%s520] %v539
                %v541 = vld [vmem:[%s527 + $0x30] sm:%s520]
                %542 = vst [vmem:[%s528 + $0x30] sm:%s520] %v541
                %v543 = vld [vmem:[%s527 + $0x38] sm:%s520]
                %544 = vst [vmem:[%s528 + $0x38] sm:%s520] %v543
                %v545 = vld [vmem:[%s527 + $0x40] sm:%s520]
                %546 = vst [vmem:[%s528 + $0x40] sm:%s520] %v545
                %v547 = vld [vmem:[%s527 + $0x48] sm:%s520]
                %548 = vst [vmem:[%s528 + $0x48] sm:%s520] %v547
                %v549 = vld [vmem:[%s527 + $0x50] sm:%s520]
                %550 = vst [vmem:[%s528 + $0x50] sm:%s520] %v549
                %v551 = vld [vmem:[%s527 + $0x58] sm:%s520]
                %552 = vst [vmem:[%s528 + $0x58] sm:%s520] %v551
                %v553 = vld [vmem:[%s527 + $0x60] sm:%s520]
                %554 = vst [vmem:[%s528 + $0x60] sm:%s520] %v553
                %v555 = vld [vmem:[%s527 + $0x68] sm:%s520]
                %556 = vst [vmem:[%s528 + $0x68] sm:%s520] %v555
                %v557 = vld [vmem:[%s527 + $0x70] sm:%s520]
                %558 = vst [vmem:[%s528 + $0x70] sm:%s520] %v557
                %v559 = vld [vmem:[%s527 + $0x78] sm:%s520]
                %560 = vst [vmem:[%s528 + $0x78] sm:%s520] %v559
                %v561 = vld [vmem:[%s527 + $0x80] sm:%s520]
                %562 = vst [vmem:[%s528 + $0x80] sm:%s520] %v561
                %v563 = vld [vmem:[%s527 + $0x88] sm:%s520]
                %564 = vst [vmem:[%s528 + $0x88] sm:%s520] %v563
                %v565 = vld [vmem:[%s527 + $0x90] sm:%s520]
                %566 = vst [vmem:[%s528 + $0x90] sm:%s520] %v565
                %v567 = vld [vmem:[%s527 + $0x98] sm:%s520]
                %568 = vst [vmem:[%s528 + $0x98] sm:%s520] %v567
                %v569 = vld [vmem:[%s527 + $0xa0] sm:%s520]
                %570 = vst [vmem:[%s528 + $0xa0] sm:%s520] %v569
                %v571 = vld [vmem:[%s527 + $0xa8] sm:%s520]
                %572 = vst [vmem:[%s528 + $0xa8] sm:%s520] %v571
                %v573 = vld [vmem:[%s527 + $0xb0] sm:%s520]
                %574 = vst [vmem:[%s528 + $0xb0] sm:%s520] %v573
                %v575 = vld [vmem:[%s527 + $0xb8] sm:%s520]
                %576 = vst [vmem:[%s528 + $0xb8] sm:%s520] %v575
                %v577 = vld [vmem:[%s527 + $0xc0] sm:%s520]
                %578 = vst [vmem:[%s528 + $0xc0] sm:%s520] %v577
                %v579 = vld [vmem:[%s527 + $0x190] sm:%s520]
                %580 = vst [vmem:[%s528 + $0xc8] sm:%s520] %v579
                %v581 = vld [vmem:[%s527 + $0x198] sm:%s520]
                %582 = vst [vmem:[%s528 + $0xd0] sm:%s520] %v581
                %v583 = vld [vmem:[%s527 + $0x1a0] sm:%s520]
                %584 = vst [vmem:[%s528 + $0xd8] sm:%s520] %v583
                %v585 = vld [vmem:[%s527 + $0x1a8] sm:%s520]
                %586 = vst [vmem:[%s528 + $0xe0] sm:%s520] %v585
                %v587 = vld [vmem:[%s527 + $0x1b0] sm:%s520]
                %588 = vst [vmem:[%s528 + $0xe8] sm:%s520] %v587
                %v589 = vld [vmem:[%s527 + $0x1b8] sm:%s520]
                %590 = vst [vmem:[%s528 + $0xf0] sm:%s520] %v589
                %v591 = vld [vmem:[%s527 + $0x1c0] sm:%s520]
                %592 = vst [vmem:[%s528 + $0xf8] sm:%s520] %v591
                %v593 = vld [vmem:[%s527 + $0x1c8] sm:%s520]
                %594 = vst [vmem:[%s528 + $0x100] sm:%s520] %v593
                %v595 = vld [vmem:[%s527 + $0x1d0] sm:%s520]
                %596 = vst [vmem:[%s528 + $0x108] sm:%s520] %v595
                %v597 = vld [vmem:[%s527 + $0x1d8] sm:%s520]
                %598 = vst [vmem:[%s528 + $0x110] sm:%s520] %v597
                %v599 = vld [vmem:[%s527 + $0x1e0] sm:%s520]
                %600 = vst [vmem:[%s528 + $0x118] sm:%s520] %v599
                %v601 = vld [vmem:[%s527 + $0x1e8] sm:%s520]
                %602 = vst [vmem:[%s528 + $0x120] sm:%s520] %v601
                %v603 = vld [vmem:[%s527 + $0x1f0] sm:%s520]
                %604 = vst [vmem:[%s528 + $0x128] sm:%s520] %v603
                %v605 = vld [vmem:[%s527 + $0x1f8] sm:%s520]
                %606 = vst [vmem:[%s528 + $0x130] sm:%s520] %v605
                %v607 = vld [vmem:[%s527 + $0x200] sm:%s520]
                %608 = vst [vmem:[%s528 + $0x138] sm:%s520] %v607
                %v609 = vld [vmem:[%s527 + $0x208] sm:%s520]
                %610 = vst [vmem:[%s528 + $0x140] sm:%s520] %v609
                %v611 = vld [vmem:[%s527 + $0x210] sm:%s520]
                %612 = vst [vmem:[%s528 + $0x148] sm:%s520] %v611
                %v613 = vld [vmem:[%s527 + $0x218] sm:%s520]
                %614 = vst [vmem:[%s528 + $0x150] sm:%s520] %v613
                %v615 = vld [vmem:[%s527 + $0x220] sm:%s520]
                %616 = vst [vmem:[%s528 + $0x158] sm:%s520] %v615
                %v617 = vld [vmem:[%s527 + $0x228] sm:%s520]
                %618 = vst [vmem:[%s528 + $0x160] sm:%s520] %v617
                %v619 = vld [vmem:[%s527 + $0x230] sm:%s520]
                %620 = vst [vmem:[%s528 + $0x168] sm:%s520] %v619
                %v621 = vld [vmem:[%s527 + $0x238] sm:%s520]
                %622 = vst [vmem:[%s528 + $0x170] sm:%s520] %v621
                %v623 = vld [vmem:[%s527 + $0x240] sm:%s520]
                %624 = vst [vmem:[%s528 + $0x178] sm:%s520] %v623
                %v625 = vld [vmem:[%s527 + $0x248] sm:%s520]
                %626 = vst [vmem:[%s528 + $0x180] sm:%s520] %v625
                %v627 = vld [vmem:[%s527 + $0x250] sm:%s520]
                %628 = vst [vmem:[%s528 + $0x188] sm:%s520] %v627
                %v629 = vld [vmem:[%s527 + $0x320] sm:%s520]
                %630 = vst [vmem:[%s528 + $0x190] sm:%s520] %v629
                %v631 = vld [vmem:[%s527 + $0x328] sm:%s520]
                %632 = vst [vmem:[%s528 + $0x198] sm:%s520] %v631
                %v633 = vld [vmem:[%s527 + $0x330] sm:%s520]
                %634 = vst [vmem:[%s528 + $0x1a0] sm:%s520] %v633
                %v635 = vld [vmem:[%s527 + $0x338] sm:%s520]
                %636 = vst [vmem:[%s528 + $0x1a8] sm:%s520] %v635
                %v637 = vld [vmem:[%s527 + $0x340] sm:%s520]
                %638 = vst [vmem:[%s528 + $0x1b0] sm:%s520] %v637
                %v639 = vld [vmem:[%s527 + $0x348] sm:%s520]
                %640 = vst [vmem:[%s528 + $0x1b8] sm:%s520] %v639
                %v641 = vld [vmem:[%s527 + $0x350] sm:%s520]
                %642 = vst [vmem:[%s528 + $0x1c0] sm:%s520] %v641
                %v643 = vld [vmem:[%s527 + $0x358] sm:%s520]
                %644 = vst [vmem:[%s528 + $0x1c8] sm:%s520] %v643
                %v645 = vld [vmem:[%s527 + $0x360] sm:%s520]
                %646 = vst [vmem:[%s528 + $0x1d0] sm:%s520] %v645
                %v647 = vld [vmem:[%s527 + $0x368] sm:%s520]
                %648 = vst [vmem:[%s528 + $0x1d8] sm:%s520] %v647
                %v649 = vld [vmem:[%s527 + $0x370] sm:%s520]
                %650 = vst [vmem:[%s528 + $0x1e0] sm:%s520] %v649
                %v651 = vld [vmem:[%s527 + $0x378] sm:%s520]
                %652 = vst [vmem:[%s528 + $0x1e8] sm:%s520] %v651
                %v653 = vld [vmem:[%s527 + $0x380] sm:%s520]
                %654 = vst [vmem:[%s528 + $0x1f0] sm:%s520] %v653
                %v655 = vld [vmem:[%s527 + $0x388] sm:%s520]
                %656 = vst [vmem:[%s528 + $0x1f8] sm:%s520] %v655
                %v657 = vld [vmem:[%s527 + $0x390] sm:%s520]
                %658 = vst [vmem:[%s528 + $0x200] sm:%s520] %v657
                %v659 = vld [vmem:[%s527 + $0x398] sm:%s520]
                %660 = vst [vmem:[%s528 + $0x208] sm:%s520] %v659
                %v661 = vld [vmem:[%s527 + $0x3a0] sm:%s520]
                %662 = vst [vmem:[%s528 + $0x210] sm:%s520] %v661
                %v663 = vld [vmem:[%s527 + $0x3a8] sm:%s520]
                %664 = vst [vmem:[%s528 + $0x218] sm:%s520] %v663
                %v665 = vld [vmem:[%s527 + $0x3b0] sm:%s520]
                %666 = vst [vmem:[%s528 + $0x220] sm:%s520] %v665
                %v667 = vld [vmem:[%s527 + $0x3b8] sm:%s520]
                %668 = vst [vmem:[%s528 + $0x228] sm:%s520] %v667
                %v669 = vld [vmem:[%s527 + $0x3c0] sm:%s520]
                %670 = vst [vmem:[%s528 + $0x230] sm:%s520] %v669
                %v671 = vld [vmem:[%s527 + $0x3c8] sm:%s520]
                %672 = vst [vmem:[%s528 + $0x238] sm:%s520] %v671
                %v673 = vld [vmem:[%s527 + $0x3d0] sm:%s520]
                %674 = vst [vmem:[%s528 + $0x240] sm:%s520] %v673
                %v675 = vld [vmem:[%s527 + $0x3d8] sm:%s520]
                %676 = vst [vmem:[%s528 + $0x248] sm:%s520] %v675
                %v677 = vld [vmem:[%s527 + $0x3e0] sm:%s520]
                %678 = vst [vmem:[%s528 + $0x250] sm:%s520] %v677
                %v679 = vld [vmem:[%s527 + $0x4b0] sm:%s520]
                %680 = vst [vmem:[%s528 + $0x258] sm:%s520] %v679
                %v681 = vld [vmem:[%s527 + $0x4b8] sm:%s520]
                %682 = vst [vmem:[%s528 + $0x260] sm:%s520] %v681
                %v683 = vld [vmem:[%s527 + $0x4c0] sm:%s520]
                %684 = vst [vmem:[%s528 + $0x268] sm:%s520] %v683
                %v685 = vld [vmem:[%s527 + $0x4c8] sm:%s520]
                %686 = vst [vmem:[%s528 + $0x270] sm:%s520] %v685
                %v687 = vld [vmem:[%s527 + $0x4d0] sm:%s520]
                %688 = vst [vmem:[%s528 + $0x278] sm:%s520] %v687
                %v689 = vld [vmem:[%s527 + $0x4d8] sm:%s520]
                %690 = vst [vmem:[%s528 + $0x280] sm:%s520] %v689
                %v691 = vld [vmem:[%s527 + $0x4e0] sm:%s520]
                %692 = vst [vmem:[%s528 + $0x288] sm:%s520] %v691
                %v693 = vld [vmem:[%s527 + $0x4e8] sm:%s520]
                %694 = vst [vmem:[%s528 + $0x290] sm:%s520] %v693
                %v695 = vld [vmem:[%s527 + $0x4f0] sm:%s520]
                %696 = vst [vmem:[%s528 + $0x298] sm:%s520] %v695
                %v697 = vld [vmem:[%s527 + $0x4f8] sm:%s520]
                %698 = vst [vmem:[%s528 + $0x2a0] sm:%s520] %v697
                %v699 = vld [vmem:[%s527 + $0x500] sm:%s520]
                %700 = vst [vmem:[%s528 + $0x2a8] sm:%s520] %v699
                %v701 = vld [vmem:[%s527 + $0x508] sm:%s520]
                %702 = vst [vmem:[%s528 + $0x2b0] sm:%s520] %v701
                %v703 = vld [vmem:[%s527 + $0x510] sm:%s520]
                %704 = vst [vmem:[%s528 + $0x2b8] sm:%s520] %v703
                %v705 = vld [vmem:[%s527 + $0x518] sm:%s520]
                %706 = vst [vmem:[%s528 + $0x2c0] sm:%s520] %v705
                %v707 = vld [vmem:[%s527 + $0x520] sm:%s520]
                %708 = vst [vmem:[%s528 + $0x2c8] sm:%s520] %v707
                %v709 = vld [vmem:[%s527 + $0x528] sm:%s520]
                %710 = vst [vmem:[%s528 + $0x2d0] sm:%s520] %v709
                %v711 = vld [vmem:[%s527 + $0x530] sm:%s520]
                %712 = vst [vmem:[%s528 + $0x2d8] sm:%s520] %v711
                %v713 = vld [vmem:[%s527 + $0x538] sm:%s520]
                %714 = vst [vmem:[%s528 + $0x2e0] sm:%s520] %v713
                %v715 = vld [vmem:[%s527 + $0x540] sm:%s520]
                %716 = vst [vmem:[%s528 + $0x2e8] sm:%s520] %v715
                %v717 = vld [vmem:[%s527 + $0x548] sm:%s520]
                %718 = vst [vmem:[%s528 + $0x2f0] sm:%s520] %v717
                %v719 = vld [vmem:[%s527 + $0x550] sm:%s520]
                %720 = vst [vmem:[%s528 + $0x2f8] sm:%s520] %v719
                %v721 = vld [vmem:[%s527 + $0x558] sm:%s520]
                %722 = vst [vmem:[%s528 + $0x300] sm:%s520] %v721
                %v723 = vld [vmem:[%s527 + $0x560] sm:%s520]
                %724 = vst [vmem:[%s528 + $0x308] sm:%s520] %v723
                %v725 = vld [vmem:[%s527 + $0x568] sm:%s520]
                %726 = vst [vmem:[%s528 + $0x310] sm:%s520] %v725
                %v727 = vld [vmem:[%s527 + $0x570] sm:%s520]
                %728 = vst [vmem:[%s528 + $0x318] sm:%s520] %v727
                %v729 = vld [vmem:[%s527 + $0x640] sm:%s520]
                %730 = vst [vmem:[%s528 + $0x320] sm:%s520] %v729
                %v731 = vld [vmem:[%s527 + $0x648] sm:%s520]
                %732 = vst [vmem:[%s528 + $0x328] sm:%s520] %v731
                %v733 = vld [vmem:[%s527 + $0x650] sm:%s520]
                %734 = vst [vmem:[%s528 + $0x330] sm:%s520] %v733
                %v735 = vld [vmem:[%s527 + $0x658] sm:%s520]
                %736 = vst [vmem:[%s528 + $0x338] sm:%s520] %v735
                %v737 = vld [vmem:[%s527 + $0x660] sm:%s520]
                %738 = vst [vmem:[%s528 + $0x340] sm:%s520] %v737
                %v739 = vld [vmem:[%s527 + $0x668] sm:%s520]
                %740 = vst [vmem:[%s528 + $0x348] sm:%s520] %v739
                %v741 = vld [vmem:[%s527 + $0x670] sm:%s520]
                %742 = vst [vmem:[%s528 + $0x350] sm:%s520] %v741
                %v743 = vld [vmem:[%s527 + $0x678] sm:%s520]
                %744 = vst [vmem:[%s528 + $0x358] sm:%s520] %v743
                %v745 = vld [vmem:[%s527 + $0x680] sm:%s520]
                %746 = vst [vmem:[%s528 + $0x360] sm:%s520] %v745
                %v747 = vld [vmem:[%s527 + $0x688] sm:%s520]
                %748 = vst [vmem:[%s528 + $0x368] sm:%s520] %v747
                %v749 = vld [vmem:[%s527 + $0x690] sm:%s520]
                %750 = vst [vmem:[%s528 + $0x370] sm:%s520] %v749
                %v751 = vld [vmem:[%s527 + $0x698] sm:%s520]
                %752 = vst [vmem:[%s528 + $0x378] sm:%s520] %v751
                %v753 = vld [vmem:[%s527 + $0x6a0] sm:%s520]
                %754 = vst [vmem:[%s528 + $0x380] sm:%s520] %v753
                %v755 = vld [vmem:[%s527 + $0x6a8] sm:%s520]
                %756 = vst [vmem:[%s528 + $0x388] sm:%s520] %v755
                %v757 = vld [vmem:[%s527 + $0x6b0] sm:%s520]
                %758 = vst [vmem:[%s528 + $0x390] sm:%s520] %v757
                %v759 = vld [vmem:[%s527 + $0x6b8] sm:%s520]
                %760 = vst [vmem:[%s528 + $0x398] sm:%s520] %v759
                %v761 = vld [vmem:[%s527 + $0x6c0] sm:%s520]
                %762 = vst [vmem:[%s528 + $0x3a0] sm:%s520] %v761
                %v763 = vld [vmem:[%s527 + $0x6c8] sm:%s520]
                %764 = vst [vmem:[%s528 + $0x3a8] sm:%s520] %v763
                %v765 = vld [vmem:[%s527 + $0x6d0] sm:%s520]
                %766 = vst [vmem:[%s528 + $0x3b0] sm:%s520] %v765
                %v767 = vld [vmem:[%s527 + $0x6d8] sm:%s520]
                %768 = vst [vmem:[%s528 + $0x3b8] sm:%s520] %v767
                %v769 = vld [vmem:[%s527 + $0x6e0] sm:%s520]
                %770 = vst [vmem:[%s528 + $0x3c0] sm:%s520] %v769
                %v771 = vld [vmem:[%s527 + $0x6e8] sm:%s520]
                %772 = vst [vmem:[%s528 + $0x3c8] sm:%s520] %v771
                %v773 = vld [vmem:[%s527 + $0x6f0] sm:%s520]
                %774 = vst [vmem:[%s528 + $0x3d0] sm:%s520] %v773
                %v775 = vld [vmem:[%s527 + $0x6f8] sm:%s520]
                %776 = vst [vmem:[%s528 + $0x3d8] sm:%s520] %v775
                %v777 = vld [vmem:[%s527 + $0x700] sm:%s520]
                %778 = vst [vmem:[%s528 + $0x3e0] sm:%s520] %v777
              $region83: #{m_forward.1} parent=77 // loop_footer
                %s526 = sadd.s32 1, %s522
              $region84: #{m_forward.1} parent=77 // loop_footer_branch
                %521 = sbr.rel target = $region80
              $region85: #{m_forward.1} parent=77 // loop_exit
                _
            $region78: #{m_forward.1} parent=69 // pred_fallthru
              _
          $region70: #{m_forward.1} parent=65 // pred_fallthru
            _
          %1041 = vnop
        $region66: #{m_forward.1} parent=23 // pred_fallthru
          _
      $region24: #{m_forward.1} parent=5 // pred_fallthru
        _
      %p1042 = scmp.le.s32.totalorder 1, %s12
      %p1043 = scmp.lt.s32.totalorder %s12, 3
      %p1044 = pnand %p1042, %p1043
      %p1045 = pneg %p1044
      // Predicated region
      $region101: #{m_forward.1} parent=5 // pred_check
        _
      $region102: #{m_forward.1} parent=5 // pred_check_branch
        %1047 = sbr.rel (%p1044) target = $region104
      $region103: #{m_forward.1} parent=5 // pred_region
        %s1048 = ssub.s32 %s12, 1
        // Predicated region
        $region105: #{m_forward.1} parent=103 // pred_check
          %p1049 = pneg %p33
        $region106: #{m_forward.1} parent=103 // pred_check_branch
          %1051 = sbr.rel (%p1049) target = $region108
        $region107: #{m_forward.1} parent=103 // pred_region
          %1053 = dma.done [#allocation4], 16
        $region108: #{m_forward.1} parent=103 // pred_fallthru
          _
        %s1054 = sand.u32 %s67, 1
        %s1055 = sand.u32 %s67, 1
        %s1056 = smul.addr %s1055, 600
        %s1057 = scalar_lea.vmem [#allocation5], %s1056
        // Predicated region
        $region109: #{m_forward.1} parent=103 // pred_check
          %p1058 = pneg %p80
        $region110: #{m_forward.1} parent=103 // pred_check_branch
          %1060 = sbr.rel (%p1058) target = $region112
        $region111: #{m_forward.1} parent=103 // pred_region
          _
        $region112: #{m_forward.1} parent=103 // pred_fallthru
          _
        %s1061 = sand.u32 %s93, 1
        %s1062 = sand.u32 %s93, 1
        %s1063 = smul.addr %s1062, 1000
        %s1064 = scalar_lea.vmem [#allocation6], %s1063
        // Predicated region
        $region113: #{m_forward.1} parent=103 // pred_check
          %p1065 = pneg %p106
        $region114: #{m_forward.1} parent=103 // pred_check_branch
          %1067 = sbr.rel (%p1065) target = $region116
        $region115: #{m_forward.1} parent=103 // pred_region
          _
        $region116: #{m_forward.1} parent=103 // pred_fallthru
          _
        %1068 = sfence
        %p1069 = pneg %p33
        %p1070 = pneg %p30
        %p1071 = pneg %p54
        %p1072 = pneg %p51
        %s1073 = sand.u32 %s67, 1
        %s1074 = sand.u32 %s67, 1
        %s1075 = smul.addr %s1074, 600
        %s1076 = scalar_lea.vmem [#allocation5], %s1075
        %p1077 = pneg %p80
        %p1078 = pneg %p77
        %s1079 = sand.u32 %s93, 1
        %s1080 = sand.u32 %s93, 1
        %s1081 = smul.addr %s1080, 1000
        %s1082 = scalar_lea.vmem [#allocation6], %s1081
        %p1083 = pneg %p106
        %p1084 = pneg %p103
        %p1085 = pneg %p132
        %p1086 = pneg %p129
        %p1087 = scmp.lt.s32.totalorder %s17, 1
        %s1088 = scalar_select %p1087, %s17, 1
        %s1089 = scalar_lea.vmem %s4, %s1088
        %p1090 = scmp.lt.s32.totalorder %s17, 1
        %s1091 = scalar_select %p1090, %s17, 1
        %s1092 = scalar_lea.vmem %s4, %s1091
        %s1093 = sld [smem:[#allocation3]]
        %v1094 = vld [vmem:[%s1057] sm:$0xff]
        %v1095 = vld [vmem:[%s1057 + $0x8] sm:$0xff]
        %v1096 = vld [vmem:[%s1057 + $0x10] sm:$0xff]
        %v1097 = vld [vmem:[%s1057 + $0x18] sm:$0xff]
        %v1098 = vld [vmem:[%s1057 + $0x20] sm:$0xff]
        %v1099 = vld [vmem:[%s1057 + $0x28] sm:$0xff]
        %v1100 = vld [vmem:[%s1057 + $0x30] sm:$0xff]
        %v1101 = vld [vmem:[%s1057 + $0x38] sm:$0xff]
        %v1102 = vld [vmem:[%s1057 + $0x40] sm:$0xff]
        %v1103 = vld [vmem:[%s1057 + $0x48] sm:$0xff]
        %v1104 = vld [vmem:[%s1057 + $0x50] sm:$0xff]
        %v1105 = vld [vmem:[%s1057 + $0x58] sm:$0xff]
        %v1106 = vld [vmem:[%s1057 + $0x60] sm:$0xff]
        %v1107 = vld [vmem:[%s1057 + $0x68] sm:$0xff]
        %v1108 = vld [vmem:[%s1057 + $0x70] sm:$0xff]
        %v1109 = vld [vmem:[%s1057 + $0x78] sm:$0xff]
        %v1110 = vld [vmem:[%s1057 + $0x80] sm:$0xff]
        %v1111 = vld [vmem:[%s1057 + $0x88] sm:$0xff]
        %v1112 = vld [vmem:[%s1057 + $0x90] sm:$0xff]
        %v1113 = vld [vmem:[%s1057 + $0x98] sm:$0xff]
        %v1114 = vld [vmem:[%s1057 + $0xa0] sm:$0xff]
        %v1115 = vld [vmem:[%s1057 + $0xa8] sm:$0xff]
        %v1116 = vld [vmem:[%s1057 + $0xb0] sm:$0xff]
        %v1117 = vld [vmem:[%s1057 + $0xb8] sm:$0xff]
        %v1118 = vld [vmem:[%s1057 + $0xc0] sm:$0xf]
        %v1119 = vstv %s1093
        %v1120 = vmul.f32 %v1119, %v1094
        %v1121 = vmul.f32 %v1119, %v1095
        %v1122 = vmul.f32 %v1119, %v1096
        %v1123 = vmul.f32 %v1119, %v1097
        %v1124 = vmul.f32 %v1119, %v1098
        %v1125 = vmul.f32 %v1119, %v1099
        %v1126 = vmul.f32 %v1119, %v1100
        %v1127 = vmul.f32 %v1119, %v1101
        %v1128 = vmul.f32 %v1119, %v1102
        %v1129 = vmul.f32 %v1119, %v1103
        %v1130 = vmul.f32 %v1119, %v1104
        %v1131 = vmul.f32 %v1119, %v1105
        %v1132 = vmul.f32 %v1119, %v1106
        %v1133 = vmul.f32 %v1119, %v1107
        %v1134 = vmul.f32 %v1119, %v1108
        %v1135 = vmul.f32 %v1119, %v1109
        %v1136 = vmul.f32 %v1119, %v1110
        %v1137 = vmul.f32 %v1119, %v1111
        %v1138 = vmul.f32 %v1119, %v1112
        %v1139 = vmul.f32 %v1119, %v1113
        %v1140 = vmul.f32 %v1119, %v1114
        %v1141 = vmul.f32 %v1119, %v1115
        %v1142 = vmul.f32 %v1119, %v1116
        %v1143 = vmul.f32 %v1119, %v1117
        %v1144 = vmul.f32 %v1119, %v1118
        %s1145 = sld [smem:[#allocation3 + $0x1]]
        %s1146 = scalar_lea.vmem %s1057, 200 [#allocation5]
        %v1147 = vld [vmem:[%s1146] sm:$0xff]
        %v1148 = vld [vmem:[%s1146 + $0x8] sm:$0xff]
        %v1149 = vld [vmem:[%s1146 + $0x10] sm:$0xff]
        %v1150 = vld [vmem:[%s1146 + $0x18] sm:$0xff]
        %v1151 = vld [vmem:[%s1146 + $0x20] sm:$0xff]
        %v1152 = vld [vmem:[%s1146 + $0x28] sm:$0xff]
        %v1153 = vld [vmem:[%s1146 + $0x30] sm:$0xff]
        %v1154 = vld [vmem:[%s1146 + $0x38] sm:$0xff]
        %v1155 = vld [vmem:[%s1146 + $0x40] sm:$0xff]
        %v1156 = vld [vmem:[%s1146 + $0x48] sm:$0xff]
        %v1157 = vld [vmem:[%s1146 + $0x50] sm:$0xff]
        %v1158 = vld [vmem:[%s1146 + $0x58] sm:$0xff]
        %v1159 = vld [vmem:[%s1146 + $0x60] sm:$0xff]
        %v1160 = vld [vmem:[%s1146 + $0x68] sm:$0xff]
        %v1161 = vld [vmem:[%s1146 + $0x70] sm:$0xff]
        %v1162 = vld [vmem:[%s1146 + $0x78] sm:$0xff]
        %v1163 = vld [vmem:[%s1146 + $0x80] sm:$0xff]
        %v1164 = vld [vmem:[%s1146 + $0x88] sm:$0xff]
        %v1165 = vld [vmem:[%s1146 + $0x90] sm:$0xff]
        %v1166 = vld [vmem:[%s1146 + $0x98] sm:$0xff]
        %v1167 = vld [vmem:[%s1146 + $0xa0] sm:$0xff]
        %v1168 = vld [vmem:[%s1146 + $0xa8] sm:$0xff]
        %v1169 = vld [vmem:[%s1146 + $0xb0] sm:$0xff]
        %v1170 = vld [vmem:[%s1146 + $0xb8] sm:$0xff]
        %v1171 = vld [vmem:[%s1146 + $0xc0] sm:$0xf]
        %v1172 = vstv %s1145
        %v1173 = vmul.f32 %v1172, %v1147
        %v1174 = vmul.f32 %v1172, %v1148
        %v1175 = vmul.f32 %v1172, %v1149
        %v1176 = vmul.f32 %v1172, %v1150
        %v1177 = vmul.f32 %v1172, %v1151
        %v1178 = vmul.f32 %v1172, %v1152
        %v1179 = vmul.f32 %v1172, %v1153
        %v1180 = vmul.f32 %v1172, %v1154
        %v1181 = vmul.f32 %v1172, %v1155
        %v1182 = vmul.f32 %v1172, %v1156
        %v1183 = vmul.f32 %v1172, %v1157
        %v1184 = vmul.f32 %v1172, %v1158
        %v1185 = vmul.f32 %v1172, %v1159
        %v1186 = vmul.f32 %v1172, %v1160
        %v1187 = vmul.f32 %v1172, %v1161
        %v1188 = vmul.f32 %v1172, %v1162
        %v1189 = vmul.f32 %v1172, %v1163
        %v1190 = vmul.f32 %v1172, %v1164
        %v1191 = vmul.f32 %v1172, %v1165
        %v1192 = vmul.f32 %v1172, %v1166
        %v1193 = vmul.f32 %v1172, %v1167
        %v1194 = vmul.f32 %v1172, %v1168
        %v1195 = vmul.f32 %v1172, %v1169
        %v1196 = vmul.f32 %v1172, %v1170
        %v1197 = vmul.f32 %v1172, %v1171
        %v1198 = vadd.f32 %v1120, %v1173
        %v1199 = vadd.f32 %v1121, %v1174
        %v1200 = vadd.f32 %v1122, %v1175
        %v1201 = vadd.f32 %v1123, %v1176
        %v1202 = vadd.f32 %v1124, %v1177
        %v1203 = vadd.f32 %v1125, %v1178
        %v1204 = vadd.f32 %v1126, %v1179
        %v1205 = vadd.f32 %v1127, %v1180
        %v1206 = vadd.f32 %v1128, %v1181
        %v1207 = vadd.f32 %v1129, %v1182
        %v1208 = vadd.f32 %v1130, %v1183
        %v1209 = vadd.f32 %v1131, %v1184
        %v1210 = vadd.f32 %v1132, %v1185
        %v1211 = vadd.f32 %v1133, %v1186
        %v1212 = vadd.f32 %v1134, %v1187
        %v1213 = vadd.f32 %v1135, %v1188
        %v1214 = vadd.f32 %v1136, %v1189
        %v1215 = vadd.f32 %v1137, %v1190
        %v1216 = vadd.f32 %v1138, %v1191
        %v1217 = vadd.f32 %v1139, %v1192
        %v1218 = vadd.f32 %v1140, %v1193
        %v1219 = vadd.f32 %v1141, %v1194
        %v1220 = vadd.f32 %v1142, %v1195
        %v1221 = vadd.f32 %v1143, %v1196
        %v1222 = vadd.f32 %v1144, %v1197
        %s1223 = sld [smem:[#allocation3 + $0x2]]
        %s1224 = scalar_lea.vmem %s1057, 400 [#allocation5]
        %v1225 = vld [vmem:[%s1224] sm:$0xff]
        %v1226 = vld [vmem:[%s1224 + $0x8] sm:$0xff]
        %v1227 = vld [vmem:[%s1224 + $0x10] sm:$0xff]
        %v1228 = vld [vmem:[%s1224 + $0x18] sm:$0xff]
        %v1229 = vld [vmem:[%s1224 + $0x20] sm:$0xff]
        %v1230 = vld [vmem:[%s1224 + $0x28] sm:$0xff]
        %v1231 = vld [vmem:[%s1224 + $0x30] sm:$0xff]
        %v1232 = vld [vmem:[%s1224 + $0x38] sm:$0xff]
        %v1233 = vld [vmem:[%s1224 + $0x40] sm:$0xff]
        %v1234 = vld [vmem:[%s1224 + $0x48] sm:$0xff]
        %v1235 = vld [vmem:[%s1224 + $0x50] sm:$0xff]
        %v1236 = vld [vmem:[%s1224 + $0x58] sm:$0xff]
        %v1237 = vld [vmem:[%s1224 + $0x60] sm:$0xff]
        %v1238 = vld [vmem:[%s1224 + $0x68] sm:$0xff]
        %v1239 = vld [vmem:[%s1224 + $0x70] sm:$0xff]
        %v1240 = vld [vmem:[%s1224 + $0x78] sm:$0xff]
        %v1241 = vld [vmem:[%s1224 + $0x80] sm:$0xff]
        %v1242 = vld [vmem:[%s1224 + $0x88] sm:$0xff]
        %v1243 = vld [vmem:[%s1224 + $0x90] sm:$0xff]
        %v1244 = vld [vmem:[%s1224 + $0x98] sm:$0xff]
        %v1245 = vld [vmem:[%s1224 + $0xa0] sm:$0xff]
        %v1246 = vld [vmem:[%s1224 + $0xa8] sm:$0xff]
        %v1247 = vld [vmem:[%s1224 + $0xb0] sm:$0xff]
        %v1248 = vld [vmem:[%s1224 + $0xb8] sm:$0xff]
        %v1249 = vld [vmem:[%s1224 + $0xc0] sm:$0xf]
        %v1250 = vstv %s1223
        %v1251 = vmul.f32 %v1250, %v1225
        %v1252 = vmul.f32 %v1250, %v1226
        %v1253 = vmul.f32 %v1250, %v1227
        %v1254 = vmul.f32 %v1250, %v1228
        %v1255 = vmul.f32 %v1250, %v1229
        %v1256 = vmul.f32 %v1250, %v1230
        %v1257 = vmul.f32 %v1250, %v1231
        %v1258 = vmul.f32 %v1250, %v1232
        %v1259 = vmul.f32 %v1250, %v1233
        %v1260 = vmul.f32 %v1250, %v1234
        %v1261 = vmul.f32 %v1250, %v1235
        %v1262 = vmul.f32 %v1250, %v1236
        %v1263 = vmul.f32 %v1250, %v1237
        %v1264 = vmul.f32 %v1250, %v1238
        %v1265 = vmul.f32 %v1250, %v1239
        %v1266 = vmul.f32 %v1250, %v1240
        %v1267 = vmul.f32 %v1250, %v1241
        %v1268 = vmul.f32 %v1250, %v1242
        %v1269 = vmul.f32 %v1250, %v1243
        %v1270 = vmul.f32 %v1250, %v1244
        %v1271 = vmul.f32 %v1250, %v1245
        %v1272 = vmul.f32 %v1250, %v1246
        %v1273 = vmul.f32 %v1250, %v1247
        %v1274 = vmul.f32 %v1250, %v1248
        %v1275 = vmul.f32 %v1250, %v1249
        %v1276 = vadd.f32 %v1198, %v1251
        %v1277 = vadd.f32 %v1199, %v1252
        %v1278 = vadd.f32 %v1200, %v1253
        %v1279 = vadd.f32 %v1201, %v1254
        %v1280 = vadd.f32 %v1202, %v1255
        %v1281 = vadd.f32 %v1203, %v1256
        %v1282 = vadd.f32 %v1204, %v1257
        %v1283 = vadd.f32 %v1205, %v1258
        %v1284 = vadd.f32 %v1206, %v1259
        %v1285 = vadd.f32 %v1207, %v1260
        %v1286 = vadd.f32 %v1208, %v1261
        %v1287 = vadd.f32 %v1209, %v1262
        %v1288 = vadd.f32 %v1210, %v1263
        %v1289 = vadd.f32 %v1211, %v1264
        %v1290 = vadd.f32 %v1212, %v1265
        %v1291 = vadd.f32 %v1213, %v1266
        %v1292 = vadd.f32 %v1214, %v1267
        %v1293 = vadd.f32 %v1215, %v1268
        %v1294 = vadd.f32 %v1216, %v1269
        %v1295 = vadd.f32 %v1217, %v1270
        %v1296 = vadd.f32 %v1218, %v1271
        %v1297 = vadd.f32 %v1219, %v1272
        %v1298 = vadd.f32 %v1220, %v1273
        %v1299 = vadd.f32 %v1221, %v1274
        %v1300 = vadd.f32 %v1222, %v1275
        %s1301 = sld [smem:[#allocation2]]
        %v1302 = vstv %s1301
        %v1303 = vadd.f32 %v1276, %v1302
        %v1304 = vadd.f32 %v1277, %v1302
        %v1305 = vadd.f32 %v1278, %v1302
        %v1306 = vadd.f32 %v1279, %v1302
        %v1307 = vadd.f32 %v1280, %v1302
        %v1308 = vadd.f32 %v1281, %v1302
        %v1309 = vadd.f32 %v1282, %v1302
        %v1310 = vadd.f32 %v1283, %v1302
        %v1311 = vadd.f32 %v1284, %v1302
        %v1312 = vadd.f32 %v1285, %v1302
        %v1313 = vadd.f32 %v1286, %v1302
        %v1314 = vadd.f32 %v1287, %v1302
        %v1315 = vadd.f32 %v1288, %v1302
        %v1316 = vadd.f32 %v1289, %v1302
        %v1317 = vadd.f32 %v1290, %v1302
        %v1318 = vadd.f32 %v1291, %v1302
        %v1319 = vadd.f32 %v1292, %v1302
        %v1320 = vadd.f32 %v1293, %v1302
        %v1321 = vadd.f32 %v1294, %v1302
        %v1322 = vadd.f32 %v1295, %v1302
        %v1323 = vadd.f32 %v1296, %v1302
        %v1324 = vadd.f32 %v1297, %v1302
        %v1325 = vadd.f32 %v1298, %v1302
        %v1326 = vadd.f32 %v1299, %v1302
        %v1327 = vadd.f32 %v1300, %v1302
        %v1328 = vlaneseq
        %v1329 = vand.u32 %v1328, 127
        %v1330 = vld [vmem:[%s1064] sm:$0xff]
        %v1331 = vld [vmem:[%s1064 + $0x8] sm:$0xff]
        %v1332 = vld [vmem:[%s1064 + $0x10] sm:$0xff]
        %v1333 = vld [vmem:[%s1064 + $0x18] sm:$0xff]
        %v1334 = vld [vmem:[%s1064 + $0x20] sm:$0xff]
        %v1335 = vld [vmem:[%s1064 + $0x28] sm:$0xff]
        %v1336 = vld [vmem:[%s1064 + $0x30] sm:$0xff]
        %v1337 = vld [vmem:[%s1064 + $0x38] sm:$0xff]
        %v1338 = vld [vmem:[%s1064 + $0x40] sm:$0xff]
        %v1339 = vld [vmem:[%s1064 + $0x48] sm:$0xff]
        %v1340 = vld [vmem:[%s1064 + $0x50] sm:$0xff]
        %v1341 = vld [vmem:[%s1064 + $0x58] sm:$0xff]
        %v1342 = vld [vmem:[%s1064 + $0x60] sm:$0xff]
        %v1343 = vld [vmem:[%s1064 + $0x68] sm:$0xff]
        %v1344 = vld [vmem:[%s1064 + $0x70] sm:$0xff]
        %v1345 = vld [vmem:[%s1064 + $0x78] sm:$0xff]
        %v1346 = vld [vmem:[%s1064 + $0x80] sm:$0xff]
        %v1347 = vld [vmem:[%s1064 + $0x88] sm:$0xff]
        %v1348 = vld [vmem:[%s1064 + $0x90] sm:$0xff]
        %v1349 = vld [vmem:[%s1064 + $0x98] sm:$0xff]
        %v1350 = vld [vmem:[%s1064 + $0xa0] sm:$0xff]
        %v1351 = vld [vmem:[%s1064 + $0xa8] sm:$0xff]
        %v1352 = vld [vmem:[%s1064 + $0xb0] sm:$0xff]
        %v1353 = vld [vmem:[%s1064 + $0xb8] sm:$0xff]
        %v1354 = vld [vmem:[%s1064 + $0xc0] sm:$0xf]
        %v1355 = vmul.f32 %v1303, %v1330
        %v1356 = vmul.f32 %v1304, %v1331
        %v1357 = vmul.f32 %v1305, %v1332
        %v1358 = vmul.f32 %v1306, %v1333
        %v1359 = vmul.f32 %v1307, %v1334
        %v1360 = vmul.f32 %v1308, %v1335
        %v1361 = vmul.f32 %v1309, %v1336
        %v1362 = vmul.f32 %v1310, %v1337
        %v1363 = vmul.f32 %v1311, %v1338
        %v1364 = vmul.f32 %v1312, %v1339
        %v1365 = vmul.f32 %v1313, %v1340
        %v1366 = vmul.f32 %v1314, %v1341
        %v1367 = vmul.f32 %v1315, %v1342
        %v1368 = vmul.f32 %v1316, %v1343
        %v1369 = vmul.f32 %v1317, %v1344
        %v1370 = vmul.f32 %v1318, %v1345
        %v1371 = vmul.f32 %v1319, %v1346
        %v1372 = vmul.f32 %v1320, %v1347
        %v1373 = vmul.f32 %v1321, %v1348
        %v1374 = vmul.f32 %v1322, %v1349
        %v1375 = vmul.f32 %v1323, %v1350
        %v1376 = vmul.f32 %v1324, %v1351
        %v1377 = vmul.f32 %v1325, %v1352
        %v1378 = vmul.f32 %v1326, %v1353
        %v1379 = vmul.f32 %v1327, %v1354
        %v1380 = vadd.f32 %v1355, %v1356
        %v1381 = vadd.f32 %v1380, %v1357
        %v1382 = vadd.f32 %v1381, %v1358
        %v1383 = vadd.f32 %v1382, %v1359
        %v1384 = vadd.f32 %v1383, %v1360
        %v1385 = vadd.f32 %v1384, %v1361
        %v1386 = vadd.f32 %v1385, %v1362
        %v1387 = vadd.f32 %v1386, %v1363
        %v1388 = vadd.f32 %v1387, %v1364
        %v1389 = vadd.f32 %v1388, %v1365
        %v1390 = vadd.f32 %v1389, %v1366
        %v1391 = vadd.f32 %v1390, %v1367
        %v1392 = vadd.f32 %v1391, %v1368
        %v1393 = vadd.f32 %v1392, %v1369
        %v1394 = vadd.f32 %v1393, %v1370
        %v1395 = vadd.f32 %v1394, %v1371
        %v1396 = vadd.f32 %v1395, %v1372
        %v1397 = vadd.f32 %v1396, %v1373
        %v1398 = vadd.f32 %v1397, %v1374
        %v1399 = vadd.f32 %v1398, %v1375
        %v1400 = vadd.f32 %v1399, %v1376
        %v1401 = vadd.f32 %v1400, %v1377
        %v1402 = vadd.f32 %v1401, %v1378
        %vm1403 = vcmask 1043456
        %v1404 = vsel %vm1403, %v1379, 0.0
        %v1405 = vadd.f32 %v1402, %v1404
        %1406 = vadd.xlane.f32.xlu0 %v1405
        %v1407 = vpop.xlane.xlu0 %1406
        %v1408 = vrot.slane %v1407, 4
        %v1409 = vadd.f32 %v1407, %v1408
        %v1410 = vrot.slane %v1409, 2
        %v1411 = vadd.f32 %v1409, %v1410
        %v1412 = vrot.slane %v1411, 1
        %v1413 = vadd.f32 %v1411, %v1412
        %s1414 = vtos %v1413
        %vm1415 = vcmp.eq.s32.totalorder %v1329, 0
        %v1416 = vstv %s1414
        %v1417 = vsel %vm1415, %v1416, 0.0
        %s1418 = scalar_lea.vmem %s1064, 200 [#allocation6]
        %v1419 = vld [vmem:[%s1418] sm:$0xff]
        %v1420 = vld [vmem:[%s1418 + $0x8] sm:$0xff]
        %v1421 = vld [vmem:[%s1418 + $0x10] sm:$0xff]
        %v1422 = vld [vmem:[%s1418 + $0x18] sm:$0xff]
        %v1423 = vld [vmem:[%s1418 + $0x20] sm:$0xff]
        %v1424 = vld [vmem:[%s1418 + $0x28] sm:$0xff]
        %v1425 = vld [vmem:[%s1418 + $0x30] sm:$0xff]
        %v1426 = vld [vmem:[%s1418 + $0x38] sm:$0xff]
        %v1427 = vld [vmem:[%s1418 + $0x40] sm:$0xff]
        %v1428 = vld [vmem:[%s1418 + $0x48] sm:$0xff]
        %v1429 = vld [vmem:[%s1418 + $0x50] sm:$0xff]
        %v1430 = vld [vmem:[%s1418 + $0x58] sm:$0xff]
        %v1431 = vld [vmem:[%s1418 + $0x60] sm:$0xff]
        %v1432 = vld [vmem:[%s1418 + $0x68] sm:$0xff]
        %v1433 = vld [vmem:[%s1418 + $0x70] sm:$0xff]
        %v1434 = vld [vmem:[%s1418 + $0x78] sm:$0xff]
        %v1435 = vld [vmem:[%s1418 + $0x80] sm:$0xff]
        %v1436 = vld [vmem:[%s1418 + $0x88] sm:$0xff]
        %v1437 = vld [vmem:[%s1418 + $0x90] sm:$0xff]
        %v1438 = vld [vmem:[%s1418 + $0x98] sm:$0xff]
        %v1439 = vld [vmem:[%s1418 + $0xa0] sm:$0xff]
        %v1440 = vld [vmem:[%s1418 + $0xa8] sm:$0xff]
        %v1441 = vld [vmem:[%s1418 + $0xb0] sm:$0xff]
        %v1442 = vld [vmem:[%s1418 + $0xb8] sm:$0xff]
        %v1443 = vld [vmem:[%s1418 + $0xc0] sm:$0xf]
        %v1444 = vmul.f32 %v1303, %v1419
        %v1445 = vmul.f32 %v1304, %v1420
        %v1446 = vmul.f32 %v1305, %v1421
        %v1447 = vmul.f32 %v1306, %v1422
        %v1448 = vmul.f32 %v1307, %v1423
        %v1449 = vmul.f32 %v1308, %v1424
        %v1450 = vmul.f32 %v1309, %v1425
        %v1451 = vmul.f32 %v1310, %v1426
        %v1452 = vmul.f32 %v1311, %v1427
        %v1453 = vmul.f32 %v1312, %v1428
        %v1454 = vmul.f32 %v1313, %v1429
        %v1455 = vmul.f32 %v1314, %v1430
        %v1456 = vmul.f32 %v1315, %v1431
        %v1457 = vmul.f32 %v1316, %v1432
        %v1458 = vmul.f32 %v1317, %v1433
        %v1459 = vmul.f32 %v1318, %v1434
        %v1460 = vmul.f32 %v1319, %v1435
        %v1461 = vmul.f32 %v1320, %v1436
        %v1462 = vmul.f32 %v1321, %v1437
        %v1463 = vmul.f32 %v1322, %v1438
        %v1464 = vmul.f32 %v1323, %v1439
        %v1465 = vmul.f32 %v1324, %v1440
        %v1466 = vmul.f32 %v1325, %v1441
        %v1467 = vmul.f32 %v1326, %v1442
        %v1468 = vmul.f32 %v1327, %v1443
        %v1469 = vadd.f32 %v1444, %v1445
        %v1470 = vadd.f32 %v1469, %v1446
        %v1471 = vadd.f32 %v1470, %v1447
        %v1472 = vadd.f32 %v1471, %v1448
        %v1473 = vadd.f32 %v1472, %v1449
        %v1474 = vadd.f32 %v1473, %v1450
        %v1475 = vadd.f32 %v1474, %v1451
        %v1476 = vadd.f32 %v1475, %v1452
        %v1477 = vadd.f32 %v1476, %v1453
        %v1478 = vadd.f32 %v1477, %v1454
        %v1479 = vadd.f32 %v1478, %v1455
        %v1480 = vadd.f32 %v1479, %v1456
        %v1481 = vadd.f32 %v1480, %v1457
        %v1482 = vadd.f32 %v1481, %v1458
        %v1483 = vadd.f32 %v1482, %v1459
        %v1484 = vadd.f32 %v1483, %v1460
        %v1485 = vadd.f32 %v1484, %v1461
        %v1486 = vadd.f32 %v1485, %v1462
        %v1487 = vadd.f32 %v1486, %v1463
        %v1488 = vadd.f32 %v1487, %v1464
        %v1489 = vadd.f32 %v1488, %v1465
        %v1490 = vadd.f32 %v1489, %v1466
        %v1491 = vadd.f32 %v1490, %v1467
        %v1492 = vsel %vm1403, %v1468, 0.0
        %v1493 = vadd.f32 %v1491, %v1492
        %1494 = vadd.xlane.f32.xlu0 %v1493
        %v1495 = vpop.xlane.xlu0 %1494
        %v1496 = vrot.slane %v1495, 4
        %v1497 = vadd.f32 %v1495, %v1496
        %v1498 = vrot.slane %v1497, 2
        %v1499 = vadd.f32 %v1497, %v1498
        %v1500 = vrot.slane %v1499, 1
        %v1501 = vadd.f32 %v1499, %v1500
        %s1502 = vtos %v1501
        %vm1503 = vcmp.eq.s32.totalorder %v1329, 1
        %v1504 = vstv %s1502
        %v1505 = vsel %vm1503, %v1504, %v1417
        %s1506 = scalar_lea.vmem %s1064, 400 [#allocation6]
        %v1507 = vld [vmem:[%s1506] sm:$0xff]
        %v1508 = vld [vmem:[%s1506 + $0x8] sm:$0xff]
        %v1509 = vld [vmem:[%s1506 + $0x10] sm:$0xff]
        %v1510 = vld [vmem:[%s1506 + $0x18] sm:$0xff]
        %v1511 = vld [vmem:[%s1506 + $0x20] sm:$0xff]
        %v1512 = vld [vmem:[%s1506 + $0x28] sm:$0xff]
        %v1513 = vld [vmem:[%s1506 + $0x30] sm:$0xff]
        %v1514 = vld [vmem:[%s1506 + $0x38] sm:$0xff]
        %v1515 = vld [vmem:[%s1506 + $0x40] sm:$0xff]
        %v1516 = vld [vmem:[%s1506 + $0x48] sm:$0xff]
        %v1517 = vld [vmem:[%s1506 + $0x50] sm:$0xff]
        %v1518 = vld [vmem:[%s1506 + $0x58] sm:$0xff]
        %v1519 = vld [vmem:[%s1506 + $0x60] sm:$0xff]
        %v1520 = vld [vmem:[%s1506 + $0x68] sm:$0xff]
        %v1521 = vld [vmem:[%s1506 + $0x70] sm:$0xff]
        %v1522 = vld [vmem:[%s1506 + $0x78] sm:$0xff]
        %v1523 = vld [vmem:[%s1506 + $0x80] sm:$0xff]
        %v1524 = vld [vmem:[%s1506 + $0x88] sm:$0xff]
        %v1525 = vld [vmem:[%s1506 + $0x90] sm:$0xff]
        %v1526 = vld [vmem:[%s1506 + $0x98] sm:$0xff]
        %v1527 = vld [vmem:[%s1506 + $0xa0] sm:$0xff]
        %v1528 = vld [vmem:[%s1506 + $0xa8] sm:$0xff]
        %v1529 = vld [vmem:[%s1506 + $0xb0] sm:$0xff]
        %v1530 = vld [vmem:[%s1506 + $0xb8] sm:$0xff]
        %v1531 = vld [vmem:[%s1506 + $0xc0] sm:$0xf]
        %v1532 = vmul.f32 %v1303, %v1507
        %v1533 = vmul.f32 %v1304, %v1508
        %v1534 = vmul.f32 %v1305, %v1509
        %v1535 = vmul.f32 %v1306, %v1510
        %v1536 = vmul.f32 %v1307, %v1511
        %v1537 = vmul.f32 %v1308, %v1512
        %v1538 = vmul.f32 %v1309, %v1513
        %v1539 = vmul.f32 %v1310, %v1514
        %v1540 = vmul.f32 %v1311, %v1515
        %v1541 = vmul.f32 %v1312, %v1516
        %v1542 = vmul.f32 %v1313, %v1517
        %v1543 = vmul.f32 %v1314, %v1518
        %v1544 = vmul.f32 %v1315, %v1519
        %v1545 = vmul.f32 %v1316, %v1520
        %v1546 = vmul.f32 %v1317, %v1521
        %v1547 = vmul.f32 %v1318, %v1522
        %v1548 = vmul.f32 %v1319, %v1523
        %v1549 = vmul.f32 %v1320, %v1524
        %v1550 = vmul.f32 %v1321, %v1525
        %v1551 = vmul.f32 %v1322, %v1526
        %v1552 = vmul.f32 %v1323, %v1527
        %v1553 = vmul.f32 %v1324, %v1528
        %v1554 = vmul.f32 %v1325, %v1529
        %v1555 = vmul.f32 %v1326, %v1530
        %v1556 = vmul.f32 %v1327, %v1531
        %v1557 = vadd.f32 %v1532, %v1533
        %v1558 = vadd.f32 %v1557, %v1534
        %v1559 = vadd.f32 %v1558, %v1535
        %v1560 = vadd.f32 %v1559, %v1536
        %v1561 = vadd.f32 %v1560, %v1537
        %v1562 = vadd.f32 %v1561, %v1538
        %v1563 = vadd.f32 %v1562, %v1539
        %v1564 = vadd.f32 %v1563, %v1540
        %v1565 = vadd.f32 %v1564, %v1541
        %v1566 = vadd.f32 %v1565, %v1542
        %v1567 = vadd.f32 %v1566, %v1543
        %v1568 = vadd.f32 %v1567, %v1544
        %v1569 = vadd.f32 %v1568, %v1545
        %v1570 = vadd.f32 %v1569, %v1546
        %v1571 = vadd.f32 %v1570, %v1547
        %v1572 = vadd.f32 %v1571, %v1548
        %v1573 = vadd.f32 %v1572, %v1549
        %v1574 = vadd.f32 %v1573, %v1550
        %v1575 = vadd.f32 %v1574, %v1551
        %v1576 = vadd.f32 %v1575, %v1552
        %v1577 = vadd.f32 %v1576, %v1553
        %v1578 = vadd.f32 %v1577, %v1554
        %v1579 = vadd.f32 %v1578, %v1555
        %v1580 = vsel %vm1403, %v1556, 0.0
        %v1581 = vadd.f32 %v1579, %v1580
        %1582 = vadd.xlane.f32.xlu0 %v1581
        %v1583 = vpop.xlane.xlu0 %1582
        %v1584 = vrot.slane %v1583, 4
        %v1585 = vadd.f32 %v1583, %v1584
        %v1586 = vrot.slane %v1585, 2
        %v1587 = vadd.f32 %v1585, %v1586
        %v1588 = vrot.slane %v1587, 1
        %v1589 = vadd.f32 %v1587, %v1588
        %s1590 = vtos %v1589
        %vm1591 = vcmp.eq.s32.totalorder %v1329, 2
        %v1592 = vstv %s1590
        %v1593 = vsel %vm1591, %v1592, %v1505
        %s1594 = scalar_lea.vmem %s1064, 600 [#allocation6]
        %v1595 = vld [vmem:[%s1594] sm:$0xff]
        %v1596 = vld [vmem:[%s1594 + $0x8] sm:$0xff]
        %v1597 = vld [vmem:[%s1594 + $0x10] sm:$0xff]
        %v1598 = vld [vmem:[%s1594 + $0x18] sm:$0xff]
        %v1599 = vld [vmem:[%s1594 + $0x20] sm:$0xff]
        %v1600 = vld [vmem:[%s1594 + $0x28] sm:$0xff]
        %v1601 = vld [vmem:[%s1594 + $0x30] sm:$0xff]
        %v1602 = vld [vmem:[%s1594 + $0x38] sm:$0xff]
        %v1603 = vld [vmem:[%s1594 + $0x40] sm:$0xff]
        %v1604 = vld [vmem:[%s1594 + $0x48] sm:$0xff]
        %v1605 = vld [vmem:[%s1594 + $0x50] sm:$0xff]
        %v1606 = vld [vmem:[%s1594 + $0x58] sm:$0xff]
        %v1607 = vld [vmem:[%s1594 + $0x60] sm:$0xff]
        %v1608 = vld [vmem:[%s1594 + $0x68] sm:$0xff]
        %v1609 = vld [vmem:[%s1594 + $0x70] sm:$0xff]
        %v1610 = vld [vmem:[%s1594 + $0x78] sm:$0xff]
        %v1611 = vld [vmem:[%s1594 + $0x80] sm:$0xff]
        %v1612 = vld [vmem:[%s1594 + $0x88] sm:$0xff]
        %v1613 = vld [vmem:[%s1594 + $0x90] sm:$0xff]
        %v1614 = vld [vmem:[%s1594 + $0x98] sm:$0xff]
        %v1615 = vld [vmem:[%s1594 + $0xa0] sm:$0xff]
        %v1616 = vld [vmem:[%s1594 + $0xa8] sm:$0xff]
        %v1617 = vld [vmem:[%s1594 + $0xb0] sm:$0xff]
        %v1618 = vld [vmem:[%s1594 + $0xb8] sm:$0xff]
        %v1619 = vld [vmem:[%s1594 + $0xc0] sm:$0xf]
        %v1620 = vmul.f32 %v1303, %v1595
        %v1621 = vmul.f32 %v1304, %v1596
        %v1622 = vmul.f32 %v1305, %v1597
        %v1623 = vmul.f32 %v1306, %v1598
        %v1624 = vmul.f32 %v1307, %v1599
        %v1625 = vmul.f32 %v1308, %v1600
        %v1626 = vmul.f32 %v1309, %v1601
        %v1627 = vmul.f32 %v1310, %v1602
        %v1628 = vmul.f32 %v1311, %v1603
        %v1629 = vmul.f32 %v1312, %v1604
        %v1630 = vmul.f32 %v1313, %v1605
        %v1631 = vmul.f32 %v1314, %v1606
        %v1632 = vmul.f32 %v1315, %v1607
        %v1633 = vmul.f32 %v1316, %v1608
        %v1634 = vmul.f32 %v1317, %v1609
        %v1635 = vmul.f32 %v1318, %v1610
        %v1636 = vmul.f32 %v1319, %v1611
        %v1637 = vmul.f32 %v1320, %v1612
        %v1638 = vmul.f32 %v1321, %v1613
        %v1639 = vmul.f32 %v1322, %v1614
        %v1640 = vmul.f32 %v1323, %v1615
        %v1641 = vmul.f32 %v1324, %v1616
        %v1642 = vmul.f32 %v1325, %v1617
        %v1643 = vmul.f32 %v1326, %v1618
        %v1644 = vmul.f32 %v1327, %v1619
        %v1645 = vadd.f32 %v1620, %v1621
        %v1646 = vadd.f32 %v1645, %v1622
        %v1647 = vadd.f32 %v1646, %v1623
        %v1648 = vadd.f32 %v1647, %v1624
        %v1649 = vadd.f32 %v1648, %v1625
        %v1650 = vadd.f32 %v1649, %v1626
        %v1651 = vadd.f32 %v1650, %v1627
        %v1652 = vadd.f32 %v1651, %v1628
        %v1653 = vadd.f32 %v1652, %v1629
        %v1654 = vadd.f32 %v1653, %v1630
        %v1655 = vadd.f32 %v1654, %v1631
        %v1656 = vadd.f32 %v1655, %v1632
        %v1657 = vadd.f32 %v1656, %v1633
        %v1658 = vadd.f32 %v1657, %v1634
        %v1659 = vadd.f32 %v1658, %v1635
        %v1660 = vadd.f32 %v1659, %v1636
        %v1661 = vadd.f32 %v1660, %v1637
        %v1662 = vadd.f32 %v1661, %v1638
        %v1663 = vadd.f32 %v1662, %v1639
        %v1664 = vadd.f32 %v1663, %v1640
        %v1665 = vadd.f32 %v1664, %v1641
        %v1666 = vadd.f32 %v1665, %v1642
        %v1667 = vadd.f32 %v1666, %v1643
        %v1668 = vsel %vm1403, %v1644, 0.0
        %v1669 = vadd.f32 %v1667, %v1668
        %1670 = vadd.xlane.f32.xlu0 %v1669
        %v1671 = vpop.xlane.xlu0 %1670
        %v1672 = vrot.slane %v1671, 4
        %v1673 = vadd.f32 %v1671, %v1672
        %v1674 = vrot.slane %v1673, 2
        %v1675 = vadd.f32 %v1673, %v1674
        %v1676 = vrot.slane %v1675, 1
        %v1677 = vadd.f32 %v1675, %v1676
        %s1678 = vtos %v1677
        %vm1679 = vcmp.eq.s32.totalorder %v1329, 3
        %v1680 = vstv %s1678
        %v1681 = vsel %vm1679, %v1680, %v1593
        %s1682 = scalar_lea.vmem %s1064, 800 [#allocation6]
        %v1683 = vld [vmem:[%s1682] sm:$0xff]
        %v1684 = vld [vmem:[%s1682 + $0x8] sm:$0xff]
        %v1685 = vld [vmem:[%s1682 + $0x10] sm:$0xff]
        %v1686 = vld [vmem:[%s1682 + $0x18] sm:$0xff]
        %v1687 = vld [vmem:[%s1682 + $0x20] sm:$0xff]
        %v1688 = vld [vmem:[%s1682 + $0x28] sm:$0xff]
        %v1689 = vld [vmem:[%s1682 + $0x30] sm:$0xff]
        %v1690 = vld [vmem:[%s1682 + $0x38] sm:$0xff]
        %v1691 = vld [vmem:[%s1682 + $0x40] sm:$0xff]
        %v1692 = vld [vmem:[%s1682 + $0x48] sm:$0xff]
        %v1693 = vld [vmem:[%s1682 + $0x50] sm:$0xff]
        %v1694 = vld [vmem:[%s1682 + $0x58] sm:$0xff]
        %v1695 = vld [vmem:[%s1682 + $0x60] sm:$0xff]
        %v1696 = vld [vmem:[%s1682 + $0x68] sm:$0xff]
        %v1697 = vld [vmem:[%s1682 + $0x70] sm:$0xff]
        %v1698 = vld [vmem:[%s1682 + $0x78] sm:$0xff]
        %v1699 = vld [vmem:[%s1682 + $0x80] sm:$0xff]
        %v1700 = vld [vmem:[%s1682 + $0x88] sm:$0xff]
        %v1701 = vld [vmem:[%s1682 + $0x90] sm:$0xff]
        %v1702 = vld [vmem:[%s1682 + $0x98] sm:$0xff]
        %v1703 = vld [vmem:[%s1682 + $0xa0] sm:$0xff]
        %v1704 = vld [vmem:[%s1682 + $0xa8] sm:$0xff]
        %v1705 = vld [vmem:[%s1682 + $0xb0] sm:$0xff]
        %v1706 = vld [vmem:[%s1682 + $0xb8] sm:$0xff]
        %v1707 = vld [vmem:[%s1682 + $0xc0] sm:$0xf]
        %v1708 = vmul.f32 %v1303, %v1683
        %v1709 = vmul.f32 %v1304, %v1684
        %v1710 = vmul.f32 %v1305, %v1685
        %v1711 = vmul.f32 %v1306, %v1686
        %v1712 = vmul.f32 %v1307, %v1687
        %v1713 = vmul.f32 %v1308, %v1688
        %v1714 = vmul.f32 %v1309, %v1689
        %v1715 = vmul.f32 %v1310, %v1690
        %v1716 = vmul.f32 %v1311, %v1691
        %v1717 = vmul.f32 %v1312, %v1692
        %v1718 = vmul.f32 %v1313, %v1693
        %v1719 = vmul.f32 %v1314, %v1694
        %v1720 = vmul.f32 %v1315, %v1695
        %v1721 = vmul.f32 %v1316, %v1696
        %v1722 = vmul.f32 %v1317, %v1697
        %v1723 = vmul.f32 %v1318, %v1698
        %v1724 = vmul.f32 %v1319, %v1699
        %v1725 = vmul.f32 %v1320, %v1700
        %v1726 = vmul.f32 %v1321, %v1701
        %v1727 = vmul.f32 %v1322, %v1702
        %v1728 = vmul.f32 %v1323, %v1703
        %v1729 = vmul.f32 %v1324, %v1704
        %v1730 = vmul.f32 %v1325, %v1705
        %v1731 = vmul.f32 %v1326, %v1706
        %v1732 = vmul.f32 %v1327, %v1707
        %v1733 = vadd.f32 %v1708, %v1709
        %v1734 = vadd.f32 %v1733, %v1710
        %v1735 = vadd.f32 %v1734, %v1711
        %v1736 = vadd.f32 %v1735, %v1712
        %v1737 = vadd.f32 %v1736, %v1713
        %v1738 = vadd.f32 %v1737, %v1714
        %v1739 = vadd.f32 %v1738, %v1715
        %v1740 = vadd.f32 %v1739, %v1716
        %v1741 = vadd.f32 %v1740, %v1717
        %v1742 = vadd.f32 %v1741, %v1718
        %v1743 = vadd.f32 %v1742, %v1719
        %v1744 = vadd.f32 %v1743, %v1720
        %v1745 = vadd.f32 %v1744, %v1721
        %v1746 = vadd.f32 %v1745, %v1722
        %v1747 = vadd.f32 %v1746, %v1723
        %v1748 = vadd.f32 %v1747, %v1724
        %v1749 = vadd.f32 %v1748, %v1725
        %v1750 = vadd.f32 %v1749, %v1726
        %v1751 = vadd.f32 %v1750, %v1727
        %v1752 = vadd.f32 %v1751, %v1728
        %v1753 = vadd.f32 %v1752, %v1729
        %v1754 = vadd.f32 %v1753, %v1730
        %v1755 = vadd.f32 %v1754, %v1731
        %v1756 = vsel %vm1403, %v1732, 0.0
        %v1757 = vadd.f32 %v1755, %v1756
        %1758 = vadd.xlane.f32.xlu0 %v1757
        %v1759 = vpop.xlane.xlu0 %1758
        %v1760 = vrot.slane %v1759, 4
        %v1761 = vadd.f32 %v1759, %v1760
        %v1762 = vrot.slane %v1761, 2
        %v1763 = vadd.f32 %v1761, %v1762
        %v1764 = vrot.slane %v1763, 1
        %v1765 = vadd.f32 %v1763, %v1764
        %s1766 = vtos %v1765
        %vm1767 = vcmp.eq.s32.totalorder %v1329, 4
        %v1768 = vstv %s1766
        %v1769 = vsel %vm1767, %v1768, %v1681
        %vm1770 = vcmask 32768
        %1771 = vst.msk [vmem:[%s1092] sm:$0x1] %vm1770, %v1769
        %p1772 = scmp.lt.s32.totalorder %s17, 1
        %s1773 = scalar_select %p1772, %s17, 1
        %s1774 = scalar_lea.vmem %s4, %s1773
        // Predicated region
        $region117: #{m_forward.1} parent=103 // pred_check
          %p1775 = pneg %p129
        $region118: #{m_forward.1} parent=103 // pred_check_branch
          %1777 = sbr.rel (%p1775) target = $region120
        $region119: #{m_forward.1} parent=103 // pred_region
          _
        $region120: #{m_forward.1} parent=103 // pred_fallthru
          _
      $region104: #{m_forward.1} parent=5 // pred_fallthru
        _
      %p1778 = scmp.le.s32.totalorder 2, %s12
      // Predicated region
      $region121: #{m_forward.1} parent=5 // pred_check
        %p1779 = pneg %p1778
      $region122: #{m_forward.1} parent=5 // pred_check_branch
        %1781 = sbr.rel (%p1779) target = $region124
      $region123: #{m_forward.1} parent=5 // pred_region
        %s1782 = ssub.s32 %s12, 2
        // Predicated region
        $region125: #{m_forward.1} parent=123 // pred_check
          %p1783 = pneg %p135
        $region126: #{m_forward.1} parent=123 // pred_check_branch
          %1785 = sbr.rel (%p1783) target = $region128
        $region127: #{m_forward.1} parent=123 // pred_region
          %p1786 = scmp.lt.s32.totalorder %s18, 1
          %s1787 = scalar_select %p1786, %s18, 1
          %s1788 = scalar_lea.vmem %s4, %s1787
        $region128: #{m_forward.1} parent=123 // pred_fallthru
          _
      $region124: #{m_forward.1} parent=5 // pred_fallthru
        _
    $region6: #{m_forward.1} parent=1 // loop_footer
      %s16 = sadd.s32 1, %s12
    $region7: #{m_forward.1} parent=1 // loop_footer_branch
      %11 = sbr.rel target = $region3
    $region8: #{m_forward.1} parent=1 // loop_exit
      _
    %1789 = vsyncpa [#allocation4], 1
    %s1790 = scalar_lea.sflag [#allocation4], 1
    %1791 = vsyncpa %s1790, 1

</llo_original>
